<compile_context>
chip_gen: v7x
topology: tpu7x:2x2x1
jax: 0.10.0
libtpu: 0.0.40
codegen_flags: <defaults>
</compile_context>

<pallas_src>
import functools
import math

import jax
import jax.numpy as jnp
from jax.experimental import pallas as pl
from jax.experimental.pallas import tpu as pltpu

PAD_ROWS = 8                        # zero halo rows appended to conv scratch
CONV_ROW_TILE = 256                 # in-kernel M tile for the conv GEMMs
FC_TK_MAX = 8192                    # below this the fc runs a single K block
FC_TK_TARGET = 4096                 # K tile when the flattened K is larger
VMEM_LIMIT_BYTES = 32 * 1024 * 1024


def _pick_row_tile(m, target=128):
    """Largest M tile <= target that divides m and is sublane-aligned.

    Gives >=2 steps on the batch ("parallel") axis whenever m > target so both
    v7x TensorCores get work; falls back to a single full-extent block (always
    layout-legal) when no aligned divisor exists.
    """
    if m <= target:
        return m
    for t in range(target, 7, -1):
        if m % t == 0 and t % 8 == 0:
            return t
    return m


# ---------------------------------------------------------------------------
# Pallas kernels
# ---------------------------------------------------------------------------

def _encoder_kernel(*args, num_layers, metas, row_tile):
    """Fused conv stack for ONE image in flat-spatial (rows, C) layout.

    args = [patches, w0, b0, ..., w_{L-1}, b_{L-1}, out, buf0, (buf1)]
    Layer 0 is a plain GEMM over the pre-gathered stride-2 patches; stride-1
    layers gather their nine 3x3 taps as contiguous VMEM windows, concatenate
    them along K and run ONE (tm, 9C) x (9C, C_out) matmul per row tile.
    Inter-layer activations ping-pong between VMEM scratch buffers (no HBM).
    A few zero "pad rows" keep the shifted tap reads in-bounds; out-of-window
    columns are finite junk that only ever meets zero fc-weight columns.
    """
    x_ref = args[0]
    w_refs = [args[1 + 2 * i] for i in range(num_layers)]
    b_refs = [args[2 + 2 * i] for i in range(num_layers)]
    o_ref = args[1 + 2 * num_layers]
    bufs = list(args[2 + 2 * num_layers:])

    for li in range(num_layers):
        meta = metas[li]
        w = w_refs[li][...]
        b = b_refs[li][...]
        c_out = w.shape[-1]
        is_last = li == num_layers - 1
        src = x_ref if li == 0 else bufs[(li - 1) % len(bufs)]
        dst = o_ref if is_last else bufs[li % len(bufs)]

        def read(start, size, _src=src, _first=(li == 0)):
            if _first:
                return _src[0, pl.ds(start, size), :]
            return _src[pl.ds(start, size), :]

        def write(start, size, val, _dst=dst, _last=is_last):
            if _last:
                _dst[0, pl.ds(start, size), :] = val.astype(_dst.dtype)
            else:
                _dst[pl.ds(start, size), :] = val

        offs = meta['offsets']
        m_rows = meta['m_rows']
        for m0 in range(0, m_rows, row_tile):
            tm = min(row_tile, m_rows - m0)
            if len(offs) == 1:
                xin = read(m0 + offs[0], tm)
            else:
                xin = jnp.concatenate([read(m0 + off, tm) for off in offs],
                                      axis=-1)
            acc = jnp.dot(xin, w, preferred_element_type=jnp.float32)
            write(m0, tm, jnp.maximum(acc + b, 0.0))
        if meta['pad_rows']:
            # Keep halo / fc-alignment rows finite (zeros).
            write(m_rows, meta['pad_rows'],
                  jnp.zeros((meta['pad_rows'], c_out), jnp.float32))


def _fc_ln_kernel(x_ref, w_ref, b_ref, g_ref, bb_ref, o_ref, acc_ref, *, eps):
    """fc GEMM (bf16 operands, f32 accum) with fused LayerNorm epilogue."""
    k = pl.program_id(1)

    @pl.when(k == 0)
    def _():
        acc_ref[...] = jnp.zeros_like(acc_ref)

    acc_ref[...] += jnp.dot(x_ref[...], w_ref[...],
                            preferred_element_type=jnp.float32)

    @pl.when(k == pl.num_programs(1) - 1)
    def _():
        h = acc_ref[...] + b_ref[...]
        mean = jnp.mean(h, axis=-1, keepdims=True)
        var = jnp.mean(jnp.square(h - mean), axis=-1, keepdims=True)
        y = (h - mean) * jax.lax.rsqrt(var + eps) * g_ref[...] + bb_ref[...]
        o_ref[...] = y.astype(o_ref.dtype)


def _double_q_kernel(f_ref, a_ref, w1_ref, b1_ref, w2_ref, b2_ref,
                     w3_ref, b3_ref, q1_ref, q2_ref):
    """Both Q-head MLPs fused in one kernel; weights resident in VMEM.

    concat(feat, action) is built in-kernel (one small lane concat) and hits
    the fused W1 with a single K=d+a matmul; the final Linear(hidden, 1) is a
    lane reduction instead of a 1-wide matmul.
    """
    oa = jnp.concatenate([f_ref[...], a_ref[...]], axis=-1)
    for h, out_ref in ((0, q1_ref), (1, q2_ref)):
        h1 = jnp.maximum(
            jnp.dot(oa, w1_ref[h], preferred_element_type=jnp.float32)
            + b1_ref[pl.ds(h, 1), :], 0.0)
        h2 = jnp.maximum(
            jnp.dot(h1, w2_ref[h], preferred_element_type=jnp.float32)
            + b2_ref[pl.ds(h, 1), :], 0.0)
        q = jnp.sum(h2 * w3_ref[pl.ds(h, 1), :], axis=-1, keepdims=True) \
            + b3_ref[pl.ds(h, 1), :]
        out_ref[...] = q


# ---------------------------------------------------------------------------
# pallas_call wrappers
# ---------------------------------------------------------------------------

def encoder_conv_stack(patches, conv_layers, cfg, out_dtype=jnp.bfloat16):
    """Fused conv stack: patches (N, S0, 9*C) -> (N, out_rows, F) activations."""
    n, s0, k0 = patches.shape
    metas = cfg['metas']
    num_layers = cfg['num_layers']
    nf = cfg['num_filters']
    out_rows = cfg['enc_out_rows']
    assert len(conv_layers) == num_layers and s0 == metas[0]['m_rows']

    in_specs = [pl.BlockSpec((1, s0, k0), lambda i: (i, 0, 0))]
    operands = [patches]
    for lp in conv_layers:
        w, b = lp['w'], lp['b']
        in_specs.append(pl.BlockSpec(w.shape, lambda i: (0, 0)))
        in_specs.append(pl.BlockSpec(b.shape, lambda i: (0, 0)))
        operands.extend([w, b])

    n_bufs = min(2, num_layers - 1) if num_layers > 1 else 0
    scratch = [
        pltpu.VMEM((metas[j]['m_rows'] + metas[j]['pad_rows'], nf), jnp.float32)
        for j in range(n_bufs)
    ]
    kernel = functools.partial(_encoder_kernel, num_layers=num_layers,
                               metas=metas, row_tile=CONV_ROW_TILE)
    return pl.pallas_call(
        kernel,
        out_shape=jax.ShapeDtypeStruct((n, out_rows, nf), out_dtype),
        grid=(n,),
        in_specs=in_specs,
        out_specs=pl.BlockSpec((1, out_rows, nf), lambda i: (i, 0, 0)),
        scratch_shapes=scratch,
        compiler_params=pltpu.CompilerParams(
            dimension_semantics=("parallel",),      # megacore over batch
            vmem_limit_bytes=VMEM_LIMIT_BYTES),
    )(*operands)


def fc_layernorm(x, w, b, g, beta, *, tk, eps=1e-5):
    """y = LayerNorm(x @ w + b); x: (M, K) bf16, w: (K, D) bf16, rest f32."""
    m, k = x.shape
    d = w.shape[1]
    assert w.shape[0] == k and k % tk == 0
    tm = _pick_row_tile(m)
    grid = (m // tm, k // tk)
    kernel = functools.partial(_fc_ln_kernel, eps=eps)
    return pl.pallas_call(
        kernel,
        out_shape=jax.ShapeDtypeStruct((m, d), jnp.float32),
        grid=grid,
        in_specs=[pl.BlockSpec((tm, tk), lambda i, j: (i, j)),
                  pl.BlockSpec((tk, d), lambda i, j: (j, 0)),
                  pl.BlockSpec((1, d), lambda i, j: (0, 0)),
                  pl.BlockSpec((1, d), lambda i, j: (0, 0)),
                  pl.BlockSpec((1, d), lambda i, j: (0, 0))],
        out_specs=pl.BlockSpec((tm, d), lambda i, j: (i, 0)),
        scratch_shapes=[pltpu.VMEM((tm, d), jnp.float32)],
        compiler_params=pltpu.CompilerParams(
            dimension_semantics=("parallel", "arbitrary"),
            vmem_limit_bytes=VMEM_LIMIT_BYTES),
    )(x, w, b, g, beta)


def double_q_heads(feat, action, qp):
    """Both Q heads in one pallas_call.  Returns (q1, q2), each (M, 1)."""
    m, d = feat.shape
    a = action.shape[1]
    hd = qp['w2'].shape[-1]
    tm = _pick_row_tile(m)
    c3 = lambda i: (0, 0, 0)
    c2 = lambda i: (0, 0)
    return pl.pallas_call(
        _double_q_kernel,
        out_shape=(jax.ShapeDtypeStruct((m, 1), jnp.float32),
                   jax.ShapeDtypeStruct((m, 1), jnp.float32)),
        grid=(m // tm,),
        in_specs=[pl.BlockSpec((tm, d), lambda i: (i, 0)),
                  pl.BlockSpec((tm, a), lambda i: (i, 0)),
                  pl.BlockSpec((2, d + a, hd), c3),
                  pl.BlockSpec((2, hd), c2),
                  pl.BlockSpec((2, hd, hd), c3),
                  pl.BlockSpec((2, hd), c2),
                  pl.BlockSpec((2, hd), c2),
                  pl.BlockSpec((2, 1), c2)],
        out_specs=(pl.BlockSpec((tm, 1), lambda i: (i, 0)),
                   pl.BlockSpec((tm, 1), lambda i: (i, 0))),
        compiler_params=pltpu.CompilerParams(
            dimension_semantics=("parallel",),
            vmem_limit_bytes=VMEM_LIMIT_BYTES),
    )(feat, action, qp['w1'], qp['b1'], qp['w2'], qp['b2'], qp['w3'], qp['b3'])


# ---------------------------------------------------------------------------
# JAX glue: first-layer im2col (stride 2, raw obs only)
# ---------------------------------------------------------------------------

def im2col_stride2_nchw(obs):
    """(N, C, H, W) -> (N, OH*OW, 9*C) patches, tap-major (kh, kw), then c."""
    n, c, h, w = obs.shape
    oh = (h - 3) // 2 + 1
    ow = (w - 3) // 2 + 1
    cols = []
    for kh in range(3):
        for kw in range(3):
            v = obs[:, :, kh:kh + 2 * (oh - 1) + 1:2,
                    kw:kw + 2 * (ow - 1) + 1:2]          # (N, C, OH, OW)
            cols.append(jnp.transpose(v, (0, 2, 3, 1)))  # (N, OH, OW, C)
    patches = jnp.concatenate(cols, axis=-1)             # (N, OH, OW, 9*C)
    return patches.reshape(n, oh * ow, 9 * c)


# ---------------------------------------------------------------------------
# Parameter init (mirrors weight_init / PixelEncoder) + kernel-layout prep
# ---------------------------------------------------------------------------

def orthogonal(key, rows, cols, gain=1.0):
    """torch.nn.init.orthogonal_-style init (deterministic via JAX PRNG)."""
    big, small = max(rows, cols), min(rows, cols)
    a = jax.random.normal(key, (big, small), dtype=jnp.float32)
    q, r = jnp.linalg.qr(a)
    q = q * jnp.sign(jnp.diag(r))[None, :]
    if rows < cols:
        q = q.T
    return gain * q


def init_critic_params(key, obs_shape, action_dim, hidden_dim, feature_dim,
                       num_layers, num_filters):
    c, h, w = obs_shape
    relu_gain = math.sqrt(2.0)                 # nn.init.calculate_gain('relu')
    ki = iter(jax.random.split(key, num_layers + 8))

    # ----- raw parameters in PyTorch layout (used by the reference) ---------
    raw = {'convs': []}
    in_c, oh, ow = c, h, w
    for layer in range(num_layers):
        stride = 2 if layer == 0 else 1
        wt = jnp.zeros((num_filters, in_c, 3, 3), jnp.float32)
        wt = wt.at[:, :, 1, 1].set(
            orthogonal(next(ki), num_filters, in_c, gain=relu_gain))
        raw['convs'].append((wt, jnp.zeros((num_filters,), jnp.float32)))
        in_c = num_filters
        oh = (oh - 3) // stride + 1
        ow = (ow - 3) // stride + 1
    flat_true = num_filters * oh * ow
    raw['fc_w'] = orthogonal(next(ki), feature_dim, flat_true)
    raw['fc_b'] = jnp.zeros((feature_dim,), jnp.float32)
    raw['ln_g'] = jnp.ones((feature_dim,), jnp.float32)
    raw['ln_b'] = jnp.zeros((feature_dim,), jnp.float32)
    for name in ('q1', 'q2'):
        raw[name] = {
            'w1': orthogonal(next(ki), hidden_dim, feature_dim + action_dim),
            'b1': jnp.zeros((hidden_dim,), jnp.float32),
            'w2': orthogonal(next(ki), hidden_dim, hidden_dim),
            'b2': jnp.zeros((hidden_dim,), jnp.float32),
            'w3': orthogonal(next(ki), 1, hidden_dim),
            'b3': jnp.zeros((1,), jnp.float32),
        }

    # ----- prepared parameters in kernel layout -----------------------------
    oh0 = (h - 3) // 2 + 1
    ow0 = (w - 3) // 2 + 1
    w_s = ow0                                   # flat-spatial width stride

    conv_layers, metas = [], []
    w0, b0 = raw['convs'][0]
    # Layer 0: single GEMM over the JAX-side im2col; 1/255 folded into weights.
    w0p = jnp.transpose(w0, (2, 3, 1, 0)).reshape(9 * c, num_filters) / 255.0
    conv_layers.append({'w': w0p, 'b': b0.reshape(1, -1)})
    m_rows = oh0 * ow0
    metas.append({'offsets': (0,), 'm_rows': m_rows, 'pad_rows': PAD_ROWS})
    for li in range(1, num_layers):
        wt, bt = raw['convs'][li]
        # (9*C_in, C_out): rows ordered tap-major (kh,kw), then c_in --
        # matching the in-kernel tap-window concatenation order.
        wp = jnp.transpose(wt, (2, 3, 1, 0)).reshape(9 * num_filters,
                                                     num_filters)
        conv_layers.append({'w': wp, 'b': bt.reshape(1, -1)})
        m_rows = m_rows - 2 * w_s
        offsets = tuple(kh * w_s + kw for kh in range(3) for kw in range(3))
        metas.append({'offsets': offsets, 'm_rows': m_rows,
                      'pad_rows': PAD_ROWS})

    # fc K-tiling: pad the encoder output spatial length AT INIT so the
    # flattened K is a multiple of the fc K tile (no runtime jnp.pad).
    m_rows_last = metas[-1]['m_rows']
    k_true = m_rows_last * num_filters
    if k_true <= FC_TK_MAX:
        fc_tk = k_true
        s_out = m_rows_last
    else:
        lane_lcm = 128 * num_filters // math.gcd(128, num_filters)
        fc_tk = max(lane_lcm, (FC_TK_TARGET // lane_lcm) * lane_lcm)
        s_out = (-(-k_true // fc_tk)) * fc_tk // num_filters
    metas[-1]['pad_rows'] = s_out - m_rows_last

    # fc weight: fold the torch NCHW .view(N, -1) permutation plus the junk
    # columns / alignment-pad rows of the flat-spatial layout into the weight
    # matrix (zeros there).  Stored bf16 for MXU operands (accum stays f32).
    rows_last, valid_last = oh, ow
    wfc = raw['fc_w'].reshape(feature_dim, num_filters, rows_last, valid_last)
    wfc = jnp.transpose(wfc, (0, 2, 3, 1))                     # (D, h, w, c)
    wfc = jnp.pad(wfc, ((0, 0), (0, 0), (0, w_s - valid_last), (0, 0)))
    wfc = wfc.reshape(feature_dim, rows_last * w_s * num_filters)
    wfc = jnp.pad(wfc, ((0, 0), (0, (s_out - m_rows_last) * num_filters)))

    params = {
        'conv_layers': conv_layers,
        'fc': {'w': wfc.T.astype(jnp.bfloat16),
               'b': raw['fc_b'].reshape(1, -1)},
        'ln': {'g': raw['ln_g'].reshape(1, -1),
               'b': raw['ln_b'].reshape(1, -1)},
        'q': {
            'w1': jnp.stack([raw[q]['w1'].T for q in ('q1', 'q2')]),
            'b1': jnp.stack([raw[q]['b1'] for q in ('q1', 'q2')]),
            'w2': jnp.stack([raw[q]['w2'].T for q in ('q1', 'q2')]),
            'b2': jnp.stack([raw[q]['b2'] for q in ('q1', 'q2')]),
            'w3': jnp.stack([raw[q]['w3'][0] for q in ('q1', 'q2')]),
            'b3': jnp.stack([raw[q]['b3'] for q in ('q1', 'q2')]),
        },
    }
    cfg = {
        'metas': tuple(metas),
        'enc_out_rows': s_out,
        'fc_tk': fc_tk,
        'num_filters': num_filters,
        'num_layers': num_layers,
    }
    return params, cfg, raw


# ---------------------------------------------------------------------------
# Critic forward
# ---------------------------------------------------------------------------

def critic_forward(params, cfg, obs, action, detach_encoder=False):
    """obs: (N, C, H, W) float32 pixels in [0, 255]; action: (N, A).

    detach_encoder only affects gradients; forward numerics are identical.
    """
    obs = obs.astype(jnp.float32)
    patches = im2col_stride2_nchw(obs)            # (N, OH0*OW0, 9*C)
    conv_out = encoder_conv_stack(patches, params['conv_layers'], cfg)
    n = conv_out.shape[0]
    feat = fc_layernorm(conv_out.reshape(n, -1),   # bf16, K already tk-aligned
                        params['fc']['w'], params['fc']['b'],
                        params['ln']['g'], params['ln']['b'],
                        tk=cfg['fc_tk'])
    q1, q2 = double_q_heads(feat, action.astype(jnp.float32), params['q'])
    return q1, q2


# ---------------------------------------------------------------------------
# Pure-JAX reference of the PyTorch module (correctness check)
# ---------------------------------------------------------------------------

def reference_forward(raw, obs, action):
    hi = jax.lax.Precision.HIGHEST
    x = obs.astype(jnp.float32) / 255.0
    for i, (wt, bt) in enumerate(raw['convs']):
        stride = 2 if i == 0 else 1
        x = jax.lax.conv_general_dilated(
            x, wt, window_strides=(stride, stride), padding='VALID',
            dimension_numbers=('NCHW', 'OIHW', 'NCHW'), precision=hi)
        x = jnp.maximum(x + bt[None, :, None, None], 0.0)
    h = x.reshape(x.shape[0], -1)
    h = jnp.dot(h, raw['fc_w'].T, precision=hi) + raw['fc_b']
    mean = jnp.mean(h, axis=-1, keepdims=True)
    var = jnp.mean(jnp.square(h - mean), axis=-1, keepdims=True)
    feat = (h - mean) * jax.lax.rsqrt(var + 1e-5) * raw['ln_g'] + raw['ln_b']

    def qhead(p):
        oa = jnp.concatenate([feat, action.astype(jnp.float32)], axis=1)
        h1 = jnp.maximum(jnp.dot(oa, p['w1'].T, precision=hi) + p['b1'], 0.0)
        h2 = jnp.maximum(jnp.dot(h1, p['w2'].T, precision=hi) + p['b2'], 0.0)
        return jnp.dot(h2, p['w3'].T, precision=hi) + p['b3']

    return qhead(raw['q1']), qhead(raw['q2'])


# ---------------------------------------------------------------------------
# Demo
# ---------------------------------------------------------------------------

if __name__ == "__main__":
    key = jax.random.PRNGKey(0)
    obs_shape = (4, 16, 16)     # (C, H, W)
    action_dim = 4
    hidden_dim = 32
    encoder_feature_dim = 16
    num_layers = 2
    num_filters = 8
    batch = 2

    kp, ko, ka = jax.random.split(key, 3)
    params, cfg, raw = init_critic_params(kp, obs_shape, action_dim,
                                          hidden_dim, encoder_feature_dim,
                                          num_layers, num_filters)

    obs = jax.random.uniform(ko, (batch,) + obs_shape, jnp.float32, 0.0, 255.0)
    action = jax.random.uniform(ka, (batch, action_dim), jnp.float32, -1.0, 1.0)

    fwd = jax.jit(lambda p, o, a: critic_forward(p, cfg, o, a))
    q1, q2 = fwd(params, obs, action)
    jax.block_until_ready((q1, q2))

    assert q1.shape == (batch, 1) and q2.shape == (batch, 1)
    assert q1.dtype == jnp.float32 and q2.dtype == jnp.float32

    # Check numerics against the pure-JAX f32 reference of the PyTorch module
    # (Pallas path uses bf16 MXU operands for the fc, hence the tolerance).
    r1, r2 = reference_forward(raw, obs, action)
    assert bool(jnp.allclose(q1, r1, rtol=5e-2, atol=5e-2)), (q1, r1)
    assert bool(jnp.allclose(q2, r2, rtol=5e-2, atol=5e-2)), (q2, r2)

    print("KERNEL_OK")
</pallas_src>

<mosaic_0001>
module attributes {stable_mosaic.version = 11 : i64} {
  func.func @_encoder_kernel(%arg0: i32, %arg1: memref<1x49x36xf32, #tpu.memory_space<vmem>>, %arg2: memref<36x8xf32, #tpu.memory_space<vmem>>, %arg3: memref<1x8xf32, #tpu.memory_space<vmem>>, %arg4: memref<72x8xf32, #tpu.memory_space<vmem>>, %arg5: memref<1x8xf32, #tpu.memory_space<vmem>>, %arg6: memref<1x35x8xbf16, #tpu.memory_space<vmem>>, %arg7: memref<57x8xf32, #tpu.memory_space<vmem>>) attributes {dimension_semantics = [#tpu.dimension_semantics<parallel>], iteration_bounds = array<i64: 2>, scalar_prefetch = 0 : i64, scratch_operands = 1 : i64, tpu.core_type = #tpu.core_type<tc>, window_params = [{transform_indices = @transform_0, window_bounds = array<i64: 1, 49, 36>}, {pipeline_mode = #tpu.pipeline_mode<synchronous>, transform_indices = @transform_1, window_bounds = array<i64: 36, 8>}, {pipeline_mode = #tpu.pipeline_mode<synchronous>, transform_indices = @transform_2, window_bounds = array<i64: 1, 8>}, {pipeline_mode = #tpu.pipeline_mode<synchronous>, transform_indices = @transform_3, window_bounds = array<i64: 72, 8>}, {pipeline_mode = #tpu.pipeline_mode<synchronous>, transform_indices = @transform_4, window_bounds = array<i64: 1, 8>}, {transform_indices = @transform_5, window_bounds = array<i64: 1, 35, 8>}]} {
    %c0 = arith.constant 0 : index
    %c0_0 = arith.constant 0 : index
    %0 = vector.load %arg2[%c0, %c0_0] : memref<36x8xf32, #tpu.memory_space<vmem>>, vector<36x8xf32>
    %c0_1 = arith.constant 0 : index
    %c0_2 = arith.constant 0 : index
    %1 = vector.load %arg3[%c0_1, %c0_2] : memref<1x8xf32, #tpu.memory_space<vmem>>, vector<1x8xf32>
    %c0_3 = arith.constant 0 : index
    %c0_4 = arith.constant 0 : index
    %c0_5 = arith.constant 0 : index
    %2 = vector.load %arg1[%c0_3, %c0_4, %c0_5] : memref<1x49x36xf32, #tpu.memory_space<vmem>>, vector<1x49x36xf32>
    %3 = vector.shape_cast %2 : vector<1x49x36xf32> to vector<49x36xf32>
    %cst = arith.constant dense<0.000000e+00> : vector<49x8xf32>
    %4 = tpu.matmul %3, %0, %cst {dimension_numbers = #tpu.dot_dimension_numbers<[1], [0], [0], [1], [0, 0, 1, 1], [], []>} : vector<49x36xf32>, vector<36x8xf32>, vector<49x8xf32> -> vector<49x8xf32>
    %5 = vector.broadcast %1 : vector<1x8xf32> to vector<49x8xf32>
    %6 = arith.addf %4, %5 : vector<49x8xf32>
    %cst_6 = arith.constant 0.000000e+00 : f32
    %7 = vector.broadcast %cst_6 : f32 to vector<49x8xf32>
    %8 = arith.maximumf %6, %7 : vector<49x8xf32>
    %c0_7 = arith.constant 0 : index
    %c0_8 = arith.constant 0 : index
    %9 = vector.load %arg7[%c0_7, %c0_8] : memref<57x8xf32, #tpu.memory_space<vmem>>, vector<49x8xf32>
    tpu.vector_store %arg7[%c0_7, %c0_8], %8 {strides = array<i32>} : memref<57x8xf32, #tpu.memory_space<vmem>>, vector<49x8xf32>,
    %cst_9 = arith.constant 0.000000e+00 : f32
    %10 = vector.broadcast %cst_9 : f32 to vector<8x8xf32>
    %c49 = arith.constant 49 : index
    %c0_10 = arith.constant 0 : index
    %11 = vector.load %arg7[%c49, %c0_10] : memref<57x8xf32, #tpu.memory_space<vmem>>, vector<8x8xf32>
    tpu.vector_store %arg7[%c49, %c0_10], %10 {strides = array<i32>} : memref<57x8xf32, #tpu.memory_space<vmem>>, vector<8x8xf32>,
    %c0_11 = arith.constant 0 : index
    %c0_12 = arith.constant 0 : index
    %12 = vector.load %arg4[%c0_11, %c0_12] : memref<72x8xf32, #tpu.memory_space<vmem>>, vector<72x8xf32>
    %c0_13 = arith.constant 0 : index
    %c0_14 = arith.constant 0 : index
    %13 = vector.load %arg5[%c0_13, %c0_14] : memref<1x8xf32, #tpu.memory_space<vmem>>, vector<1x8xf32>
    %c0_15 = arith.constant 0 : index
    %c0_16 = arith.constant 0 : index
    %14 = vector.load %arg7[%c0_15, %c0_16] : memref<57x8xf32, #tpu.memory_space<vmem>>, vector<35x8xf32>
    %c1 = arith.constant 1 : index
    %c0_17 = arith.constant 0 : index
    %15 = vector.load %arg7[%c1, %c0_17] : memref<57x8xf32, #tpu.memory_space<vmem>>, vector<35x8xf32>
    %c2 = arith.constant 2 : index
    %c0_18 = arith.constant 0 : index
    %16 = vector.load %arg7[%c2, %c0_18] : memref<57x8xf32, #tpu.memory_space<vmem>>, vector<35x8xf32>
    %c7 = arith.constant 7 : index
    %c0_19 = arith.constant 0 : index
    %17 = vector.load %arg7[%c7, %c0_19] : memref<57x8xf32, #tpu.memory_space<vmem>>, vector<35x8xf32>
    %c8 = arith.constant 8 : index
    %c0_20 = arith.constant 0 : index
    %18 = vector.load %arg7[%c8, %c0_20] : memref<57x8xf32, #tpu.memory_space<vmem>>, vector<35x8xf32>
    %c9 = arith.constant 9 : index
    %c0_21 = arith.constant 0 : index
    %19 = vector.load %arg7[%c9, %c0_21] : memref<57x8xf32, #tpu.memory_space<vmem>>, vector<35x8xf32>
    %c14 = arith.constant 14 : index
    %c0_22 = arith.constant 0 : index
    %20 = vector.load %arg7[%c14, %c0_22] : memref<57x8xf32, #tpu.memory_space<vmem>>, vector<35x8xf32>
    %c15 = arith.constant 15 : index
    %c0_23 = arith.constant 0 : index
    %21 = vector.load %arg7[%c15, %c0_23] : memref<57x8xf32, #tpu.memory_space<vmem>>, vector<35x8xf32>
    %c16 = arith.constant 16 : index
    %c0_24 = arith.constant 0 : index
    %22 = vector.load %arg7[%c16, %c0_24] : memref<57x8xf32, #tpu.memory_space<vmem>>, vector<35x8xf32>
    %23 = tpu.concatenate %14, %15, %16, %17, %18, %19, %20, %21, %22 in 1 : vector<35x8xf32>, vector<35x8xf32>, vector<35x8xf32>, vector<35x8xf32>, vector<35x8xf32>, vector<35x8xf32>, vector<35x8xf32>, vector<35x8xf32>, vector<35x8xf32> -> vector<35x72xf32>
    %cst_25 = arith.constant dense<0.000000e+00> : vector<35x8xf32>
    %24 = tpu.matmul %23, %12, %cst_25 {dimension_numbers = #tpu.dot_dimension_numbers<[1], [0], [0], [1], [0, 0, 1, 1], [], []>} : vector<35x72xf32>, vector<72x8xf32>, vector<35x8xf32> -> vector<35x8xf32>
    %25 = vector.broadcast %13 : vector<1x8xf32> to vector<35x8xf32>
    %26 = arith.addf %24, %25 : vector<35x8xf32>
    %cst_26 = arith.constant 0.000000e+00 : f32
    %27 = vector.broadcast %cst_26 : f32 to vector<35x8xf32>
    %28 = arith.maximumf %26, %27 : vector<35x8xf32>
    %29 = arith.truncf %28 : vector<35x8xf32> to vector<35x8xbf16>
    %c0_27 = arith.constant 0 : index
    %c0_28 = arith.constant 0 : index
    %c0_29 = arith.constant 0 : index
    %30 = vector.load %arg6[%c0_27, %c0_28, %c0_29] : memref<1x35x8xbf16, #tpu.memory_space<vmem>>, vector<1x35x8xbf16>
    %31 = vector.shape_cast %30 : vector<1x35x8xbf16> to vector<35x8xbf16>
    %32 = vector.shape_cast %29 : vector<35x8xbf16> to vector<1x35x8xbf16>
    tpu.vector_store %arg6[%c0_27, %c0_28, %c0_29], %32 {strides = array<i32>} : memref<1x35x8xbf16, #tpu.memory_space<vmem>>, vector<1x35x8xbf16>,
    return
  }
  func.func @transform_0(%arg0: i32) -> (i32, i32, i32) {
    %c0_i32 = arith.constant 0 : i32
    %c0_i32_0 = arith.constant 0 : i32
    %c0_i32_1 = arith.constant 0 : i32
    return %arg0, %c0_i32, %c0_i32_0 : i32, i32, i32
  }
  func.func @transform_1(%arg0: i32) -> (i32, i32) {
    %c0_i32 = arith.constant 0 : i32
    %c0_i32_0 = arith.constant 0 : i32
    %c0_i32_1 = arith.constant 0 : i32
    return %c0_i32, %c0_i32_0 : i32, i32
  }
  func.func @transform_2(%arg0: i32) -> (i32, i32) {
    %c0_i32 = arith.constant 0 : i32
    %c0_i32_0 = arith.constant 0 : i32
    %c0_i32_1 = arith.constant 0 : i32
    return %c0_i32, %c0_i32_0 : i32, i32
  }
  func.func @transform_3(%arg0: i32) -> (i32, i32) {
    %c0_i32 = arith.constant 0 : i32
    %c0_i32_0 = arith.constant 0 : i32
    %c0_i32_1 = arith.constant 0 : i32
    return %c0_i32, %c0_i32_0 : i32, i32
  }
  func.func @transform_4(%arg0: i32) -> (i32, i32) {
    %c0_i32 = arith.constant 0 : i32
    %c0_i32_0 = arith.constant 0 : i32
    %c0_i32_1 = arith.constant 0 : i32
    return %c0_i32, %c0_i32_0 : i32, i32
  }
  func.func @transform_5(%arg0: i32) -> (i32, i32, i32) {
    %c0_i32 = arith.constant 0 : i32
    %c0_i32_0 = arith.constant 0 : i32
    %c0_i32_1 = arith.constant 0 : i32
    return %arg0, %c0_i32, %c0_i32_0 : i32, i32, i32
  }
}

module attributes {stable_mosaic.version = 11 : i64} {
  func.func @_fc_ln_kernel(%arg0: i32, %arg1: i32, %arg2: memref<2x280xbf16, #tpu.memory_space<vmem>>, %arg3: memref<280x16xbf16, #tpu.memory_space<vmem>>, %arg4: memref<1x16xf32, #tpu.memory_space<vmem>>, %arg5: memref<1x16xf32, #tpu.memory_space<vmem>>, %arg6: memref<1x16xf32, #tpu.memory_space<vmem>>, %arg7: memref<2x16xf32, #tpu.memory_space<vmem>>, %arg8: memref<2x16xf32, #tpu.memory_space<vmem>>) attributes {dimension_semantics = [#tpu.dimension_semantics<parallel>, #tpu.dimension_semantics<arbitrary>], iteration_bounds = array<i64: 1, 1>, scalar_prefetch = 0 : i64, scratch_operands = 1 : i64, tpu.core_type = #tpu.core_type<tc>, window_params = [{transform_indices = @transform_0, window_bounds = array<i64: 2, 280>}, {transform_indices = @transform_1, window_bounds = array<i64: 280, 16>}, {pipeline_mode = #tpu.pipeline_mode<synchronous>, transform_indices = @transform_2, window_bounds = array<i64: 1, 16>}, {pipeline_mode = #tpu.pipeline_mode<synchronous>, transform_indices = @transform_3, window_bounds = array<i64: 1, 16>}, {pipeline_mode = #tpu.pipeline_mode<synchronous>, transform_indices = @transform_4, window_bounds = array<i64: 1, 16>}, {transform_indices = @transform_5, window_bounds = array<i64: 2, 16>}]} {
    %c0_i32 = arith.constant 0 : i32
    %0 = arith.cmpi eq, %arg1, %c0_i32 : i32
    %1 = arith.extui %0 : i1 to i32
    %c0_i32_0 = arith.constant 0 : i32
    %2 = arith.cmpi ne, %1, %c0_i32_0 : i32
    scf.if %2 {
      %cst_10 = arith.constant 0.000000e+00 : f32
      %12 = vector.broadcast %cst_10 : f32 to vector<2x16xf32>
      %c0_11 = arith.constant 0 : index
      %c0_12 = arith.constant 0 : index
      %13 = vector.load %arg8[%c0_11, %c0_12] : memref<2x16xf32, #tpu.memory_space<vmem>>, vector<2x16xf32>
      tpu.vector_store %arg8[%c0_11, %c0_12], %12 {strides = array<i32>} : memref<2x16xf32, #tpu.memory_space<vmem>>, vector<2x16xf32>,
    } else {
    }
    %c0 = arith.constant 0 : index
    %c0_1 = arith.constant 0 : index
    %3 = vector.load %arg8[%c0, %c0_1] : memref<2x16xf32, #tpu.memory_space<vmem>>, vector<2x16xf32>
    %c0_2 = arith.constant 0 : index
    %c0_3 = arith.constant 0 : index
    %4 = vector.load %arg2[%c0_2, %c0_3] : memref<2x280xbf16, #tpu.memory_space<vmem>>, vector<2x280xbf16>
    %c0_4 = arith.constant 0 : index
    %c0_5 = arith.constant 0 : index
    %5 = vector.load %arg3[%c0_4, %c0_5] : memref<280x16xbf16, #tpu.memory_space<vmem>>, vector<280x16xbf16>
    %cst = arith.constant dense<0.000000e+00> : vector<2x16xf32>
    %6 = tpu.matmul %4, %5, %cst {dimension_numbers = #tpu.dot_dimension_numbers<[1], [0], [0], [1], [0, 0, 1, 1], [], []>} : vector<2x280xbf16>, vector<280x16xbf16>, vector<2x16xf32> -> vector<2x16xf32>
    %7 = arith.addf %3, %6 : vector<2x16xf32>
    %c0_6 = arith.constant 0 : index
    %c0_7 = arith.constant 0 : index
    %8 = vector.load %arg8[%c0_6, %c0_7] : memref<2x16xf32, #tpu.memory_space<vmem>>, vector<2x16xf32>
    tpu.vector_store %arg8[%c0_6, %c0_7], %7 {strides = array<i32>} : memref<2x16xf32, #tpu.memory_space<vmem>>, vector<2x16xf32>,
    %c0_i32_8 = arith.constant 0 : i32
    %9 = arith.cmpi eq, %arg1, %c0_i32_8 : i32
    %10 = arith.extui %9 : i1 to i32
    %c0_i32_9 = arith.constant 0 : i32
    %11 = arith.cmpi ne, %10, %c0_i32_9 : i32
    scf.if %11 {
      %c0_10 = arith.constant 0 : index
      %c0_11 = arith.constant 0 : index
      %12 = vector.load %arg8[%c0_10, %c0_11] : memref<2x16xf32, #tpu.memory_space<vmem>>, vector<2x16xf32>
      %c0_12 = arith.constant 0 : index
      %c0_13 = arith.constant 0 : index
      %13 = vector.load %arg4[%c0_12, %c0_13] : memref<1x16xf32, #tpu.memory_space<vmem>>, vector<1x16xf32>
      %14 = vector.broadcast %13 : vector<1x16xf32> to vector<2x16xf32>
      %15 = arith.addf %12, %14 : vector<2x16xf32>
      %cst_14 = arith.constant dense<0.000000e+00> : vector<2xf32>
      %16 = vector.multi_reduction <add>, %15, %cst_14 [1] : vector<2x16xf32> to vector<2xf32>
      %17 = vector.shape_cast %16 : vector<2xf32> to vector<2x1xf32>
      %cst_15 = arith.constant 1.600000e+01 : f32
      %18 = vector.broadcast %cst_15 : f32 to vector<2x1xf32>
      %19 = arith.divf %17, %18 : vector<2x1xf32>
      %20 = vector.broadcast %19 : vector<2x1xf32> to vector<2x16xf32>
      %21 = arith.subf %15, %20 : vector<2x16xf32>
      %22 = arith.mulf %21, %21 : vector<2x16xf32>
      %cst_16 = arith.constant dense<0.000000e+00> : vector<2xf32>
      %23 = vector.multi_reduction <add>, %22, %cst_16 [1] : vector<2x16xf32> to vector<2xf32>
      %24 = vector.shape_cast %23 : vector<2xf32> to vector<2x1xf32>
      %cst_17 = arith.constant 1.600000e+01 : f32
      %25 = vector.broadcast %cst_17 : f32 to vector<2x1xf32>
      %26 = arith.divf %24, %25 : vector<2x1xf32>
      %27 = vector.broadcast %19 : vector<2x1xf32> to vector<2x16xf32>
      %28 = arith.subf %15, %27 : vector<2x16xf32>
      %cst_18 = arith.constant 9.99999974E-6 : f32
      %29 = vector.broadcast %cst_18 : f32 to vector<2x1xf32>
      %30 = arith.addf %26, %29 : vector<2x1xf32>
      %31 = math.rsqrt %30 : vector<2x1xf32>
      %32 = vector.broadcast %31 : vector<2x1xf32> to vector<2x16xf32>
      %33 = arith.mulf %28, %32 : vector<2x16xf32>
      %c0_19 = arith.constant 0 : index
      %c0_20 = arith.constant 0 : index
      %34 = vector.load %arg5[%c0_19, %c0_20] : memref<1x16xf32, #tpu.memory_space<vmem>>, vector<1x16xf32>
      %35 = vector.broadcast %34 : vector<1x16xf32> to vector<2x16xf32>
      %36 = arith.mulf %33, %35 : vector<2x16xf32>
      %c0_21 = arith.constant 0 : index
      %c0_22 = arith.constant 0 : index
      %37 = vector.load %arg6[%c0_21, %c0_22] : memref<1x16xf32, #tpu.memory_space<vmem>>, vector<1x16xf32>
      %38 = vector.broadcast %37 : vector<1x16xf32> to vector<2x16xf32>
      %39 = arith.addf %36, %38 : vector<2x16xf32>
      %c0_23 = arith.constant 0 : index
      %c0_24 = arith.constant 0 : index
      %40 = vector.load %arg7[%c0_23, %c0_24] : memref<2x16xf32, #tpu.memory_space<vmem>>, vector<2x16xf32>
      tpu.vector_store %arg7[%c0_23, %c0_24], %39 {strides = array<i32>} : memref<2x16xf32, #tpu.memory_space<vmem>>, vector<2x16xf32>,
    } else {
    }
    return
  }
  func.func @transform_0(%arg0: i32, %arg1: i32) -> (i32, i32) {
    %c0_i32 = arith.constant 0 : i32
    return %arg0, %arg1 : i32, i32
  }
  func.func @transform_1(%arg0: i32, %arg1: i32) -> (i32, i32) {
    %c0_i32 = arith.constant 0 : i32
    %c0_i32_0 = arith.constant 0 : i32
    return %arg1, %c0_i32 : i32, i32
  }
  func.func @transform_2(%arg0: i32, %arg1: i32) -> (i32, i32) {
    %c0_i32 = arith.constant 0 : i32
    %c0_i32_0 = arith.constant 0 : i32
    %c0_i32_1 = arith.constant 0 : i32
    return %c0_i32, %c0_i32_0 : i32, i32
  }
  func.func @transform_3(%arg0: i32, %arg1: i32) -> (i32, i32) {
    %c0_i32 = arith.constant 0 : i32
    %c0_i32_0 = arith.constant 0 : i32
    %c0_i32_1 = arith.constant 0 : i32
    return %c0_i32, %c0_i32_0 : i32, i32
  }
  func.func @transform_4(%arg0: i32, %arg1: i32) -> (i32, i32) {
    %c0_i32 = arith.constant 0 : i32
    %c0_i32_0 = arith.constant 0 : i32
    %c0_i32_1 = arith.constant 0 : i32
    return %c0_i32, %c0_i32_0 : i32, i32
  }
  func.func @transform_5(%arg0: i32, %arg1: i32) -> (i32, i32) {
    %c0_i32 = arith.constant 0 : i32
    %c0_i32_0 = arith.constant 0 : i32
    return %arg0, %c0_i32 : i32, i32
  }
}

module attributes {stable_mosaic.version = 11 : i64} {
  func.func @_double_q_kernel(%arg0: i32, %arg1: memref<2x16xf32, #tpu.memory_space<vmem>>, %arg2: memref<2x4xf32, #tpu.memory_space<vmem>>, %arg3: memref<2x20x32xf32, #tpu.memory_space<vmem>>, %arg4: memref<2x32xf32, #tpu.memory_space<vmem>>, %arg5: memref<2x32x32xf32, #tpu.memory_space<vmem>>, %arg6: memref<2x32xf32, #tpu.memory_space<vmem>>, %arg7: memref<2x32xf32, #tpu.memory_space<vmem>>, %arg8: memref<2x1xf32, #tpu.memory_space<vmem>>, %arg9: memref<2x1xf32, #tpu.memory_space<vmem>>, %arg10: memref<2x1xf32, #tpu.memory_space<vmem>>) attributes {dimension_semantics = [#tpu.dimension_semantics<parallel>], iteration_bounds = array<i64: 1>, scalar_prefetch = 0 : i64, scratch_operands = 0 : i64, tpu.core_type = #tpu.core_type<tc>, window_params = [{transform_indices = @transform_0, window_bounds = array<i64: 2, 16>}, {transform_indices = @transform_1, window_bounds = array<i64: 2, 4>}, {pipeline_mode = #tpu.pipeline_mode<synchronous>, transform_indices = @transform_2, window_bounds = array<i64: 2, 20, 32>}, {pipeline_mode = #tpu.pipeline_mode<synchronous>, transform_indices = @transform_3, window_bounds = array<i64: 2, 32>}, {pipeline_mode = #tpu.pipeline_mode<synchronous>, transform_indices = @transform_4, window_bounds = array<i64: 2, 32, 32>}, {pipeline_mode = #tpu.pipeline_mode<synchronous>, transform_indices = @transform_5, window_bounds = array<i64: 2, 32>}, {pipeline_mode = #tpu.pipeline_mode<synchronous>, transform_indices = @transform_6, window_bounds = array<i64: 2, 32>}, {pipeline_mode = #tpu.pipeline_mode<synchronous>, transform_indices = @transform_7, window_bounds = array<i64: 2, 1>}, {transform_indices = @transform_8, window_bounds = array<i64: 2, 1>}, {transform_indices = @transform_9, window_bounds = array<i64: 2, 1>}]} {
    %c0 = arith.constant 0 : index
    %c0_0 = arith.constant 0 : index
    %0 = vector.load %arg1[%c0, %c0_0] : memref<2x16xf32, #tpu.memory_space<vmem>>, vector<2x16xf32>
    %c0_1 = arith.constant 0 : index
    %c0_2 = arith.constant 0 : index
    %1 = vector.load %arg2[%c0_1, %c0_2] : memref<2x4xf32, #tpu.memory_space<vmem>>, vector<2x4xf32>
    %2 = tpu.concatenate %0, %1 in 1 : vector<2x16xf32>, vector<2x4xf32> -> vector<2x20xf32>
    %c0_3 = arith.constant 0 : index
    %c0_4 = arith.constant 0 : index
    %c0_5 = arith.constant 0 : index
    %3 = vector.load %arg3[%c0_3, %c0_4, %c0_5] : memref<2x20x32xf32, #tpu.memory_space<vmem>>, vector<1x20x32xf32>
    %4 = vector.shape_cast %3 : vector<1x20x32xf32> to vector<20x32xf32>
    %cst = arith.constant dense<0.000000e+00> : vector<2x32xf32>
    %5 = tpu.matmul %2, %4, %cst {dimension_numbers = #tpu.dot_dimension_numbers<[1], [0], [0], [1], [0, 0, 1, 1], [], []>} : vector<2x20xf32>, vector<20x32xf32>, vector<2x32xf32> -> vector<2x32xf32>
    %c0_6 = arith.constant 0 : index
    %c0_7 = arith.constant 0 : index
    %6 = vector.load %arg4[%c0_6, %c0_7] : memref<2x32xf32, #tpu.memory_space<vmem>>, vector<1x32xf32>
    %7 = vector.broadcast %6 : vector<1x32xf32> to vector<2x32xf32>
    %8 = arith.addf %5, %7 : vector<2x32xf32>
    %cst_8 = arith.constant 0.000000e+00 : f32
    %9 = vector.broadcast %cst_8 : f32 to vector<2x32xf32>
    %10 = arith.maximumf %8, %9 : vector<2x32xf32>
    %c0_9 = arith.constant 0 : index
    %c0_10 = arith.constant 0 : index
    %c0_11 = arith.constant 0 : index
    %11 = vector.load %arg5[%c0_9, %c0_10, %c0_11] : memref<2x32x32xf32, #tpu.memory_space<vmem>>, vector<1x32x32xf32>
    %12 = vector.shape_cast %11 : vector<1x32x32xf32> to vector<32x32xf32>
    %cst_12 = arith.constant dense<0.000000e+00> : vector<2x32xf32>
    %13 = tpu.matmul %10, %12, %cst_12 {dimension_numbers = #tpu.dot_dimension_numbers<[1], [0], [0], [1], [0, 0, 1, 1], [], []>} : vector<2x32xf32>, vector<32x32xf32>, vector<2x32xf32> -> vector<2x32xf32>
    %c0_13 = arith.constant 0 : index
    %c0_14 = arith.constant 0 : index
    %14 = vector.load %arg6[%c0_13, %c0_14] : memref<2x32xf32, #tpu.memory_space<vmem>>, vector<1x32xf32>
    %15 = vector.broadcast %14 : vector<1x32xf32> to vector<2x32xf32>
    %16 = arith.addf %13, %15 : vector<2x32xf32>
    %cst_15 = arith.constant 0.000000e+00 : f32
    %17 = vector.broadcast %cst_15 : f32 to vector<2x32xf32>
    %18 = arith.maximumf %16, %17 : vector<2x32xf32>
    %c0_16 = arith.constant 0 : index
    %c0_17 = arith.constant 0 : index
    %19 = vector.load %arg7[%c0_16, %c0_17] : memref<2x32xf32, #tpu.memory_space<vmem>>, vector<1x32xf32>
    %20 = vector.broadcast %19 : vector<1x32xf32> to vector<2x32xf32>
    %21 = arith.mulf %18, %20 : vector<2x32xf32>
    %cst_18 = arith.constant dense<0.000000e+00> : vector<2xf32>
    %22 = vector.multi_reduction <add>, %21, %cst_18 [1] : vector<2x32xf32> to vector<2xf32>
    %23 = vector.shape_cast %22 : vector<2xf32> to vector<2x1xf32>
    %c0_19 = arith.constant 0 : index
    %c0_20 = arith.constant 0 : index
    %24 = vector.load %arg8[%c0_19, %c0_20] : memref<2x1xf32, #tpu.memory_space<vmem>>, vector<1x1xf32>
    %25 = vector.broadcast %24 : vector<1x1xf32> to vector<2x1xf32>
    %26 = arith.addf %23, %25 : vector<2x1xf32>
    %c0_21 = arith.constant 0 : index
    %c0_22 = arith.constant 0 : index
    %27 = vector.load %arg9[%c0_21, %c0_22] : memref<2x1xf32, #tpu.memory_space<vmem>>, vector<2x1xf32>
    tpu.vector_store %arg9[%c0_21, %c0_22], %26 {strides = array<i32>} : memref<2x1xf32, #tpu.memory_space<vmem>>, vector<2x1xf32>,
    %c1 = arith.constant 1 : index
    %c0_23 = arith.constant 0 : index
    %c0_24 = arith.constant 0 : index
    %28 = vector.load %arg3[%c1, %c0_23, %c0_24] : memref<2x20x32xf32, #tpu.memory_space<vmem>>, vector<1x20x32xf32>
    %29 = vector.shape_cast %28 : vector<1x20x32xf32> to vector<20x32xf32>
    %cst_25 = arith.constant dense<0.000000e+00> : vector<2x32xf32>
    %30 = tpu.matmul %2, %29, %cst_25 {dimension_numbers = #tpu.dot_dimension_numbers<[1], [0], [0], [1], [0, 0, 1, 1], [], []>} : vector<2x20xf32>, vector<20x32xf32>, vector<2x32xf32> -> vector<2x32xf32>
    %c1_26 = arith.constant 1 : index
    %c0_27 = arith.constant 0 : index
    %31 = vector.load %arg4[%c1_26, %c0_27] : memref<2x32xf32, #tpu.memory_space<vmem>>, vector<1x32xf32>
    %32 = vector.broadcast %31 : vector<1x32xf32> to vector<2x32xf32>
    %33 = arith.addf %30, %32 : vector<2x32xf32>
    %cst_28 = arith.constant 0.000000e+00 : f32
    %34 = vector.broadcast %cst_28 : f32 to vector<2x32xf32>
    %35 = arith.maximumf %33, %34 : vector<2x32xf32>
    %c1_29 = arith.constant 1 : index
    %c0_30 = arith.constant 0 : index
    %c0_31 = arith.constant 0 : index
    %36 = vector.load %arg5[%c1_29, %c0_30, %c0_31] : memref<2x32x32xf32, #tpu.memory_space<vmem>>, vector<1x32x32xf32>
    %37 = vector.shape_cast %36 : vector<1x32x32xf32> to vector<32x32xf32>
    %cst_32 = arith.constant dense<0.000000e+00> : vector<2x32xf32>
    %38 = tpu.matmul %35, %37, %cst_32 {dimension_numbers = #tpu.dot_dimension_numbers<[1], [0], [0], [1], [0, 0, 1, 1], [], []>} : vector<2x32xf32>, vector<32x32xf32>, vector<2x32xf32> -> vector<2x32xf32>
    %c1_33 = arith.constant 1 : index
    %c0_34 = arith.constant 0 : index
    %39 = vector.load %arg6[%c1_33, %c0_34] : memref<2x32xf32, #tpu.memory_space<vmem>>, vector<1x32xf32>
    %40 = vector.broadcast %39 : vector<1x32xf32> to vector<2x32xf32>
    %41 = arith.addf %38, %40 : vector<2x32xf32>
    %cst_35 = arith.constant 0.000000e+00 : f32
    %42 = vector.broadcast %cst_35 : f32 to vector<2x32xf32>
    %43 = arith.maximumf %41, %42 : vector<2x32xf32>
    %c1_36 = arith.constant 1 : index
    %c0_37 = arith.constant 0 : index
    %44 = vector.load %arg7[%c1_36, %c0_37] : memref<2x32xf32, #tpu.memory_space<vmem>>, vector<1x32xf32>
    %45 = vector.broadcast %44 : vector<1x32xf32> to vector<2x32xf32>
    %46 = arith.mulf %43, %45 : vector<2x32xf32>
    %cst_38 = arith.constant dense<0.000000e+00> : vector<2xf32>
    %47 = vector.multi_reduction <add>, %46, %cst_38 [1] : vector<2x32xf32> to vector<2xf32>
    %48 = vector.shape_cast %47 : vector<2xf32> to vector<2x1xf32>
    %c1_39 = arith.constant 1 : index
    %c0_40 = arith.constant 0 : index
    %49 = vector.load %arg8[%c1_39, %c0_40] : memref<2x1xf32, #tpu.memory_space<vmem>>, vector<1x1xf32>
    %50 = vector.broadcast %49 : vector<1x1xf32> to vector<2x1xf32>
    %51 = arith.addf %48, %50 : vector<2x1xf32>
    %c0_41 = arith.constant 0 : index
    %c0_42 = arith.constant 0 : index
    %52 = vector.load %arg10[%c0_41, %c0_42] : memref<2x1xf32, #tpu.memory_space<vmem>>, vector<2x1xf32>
    tpu.vector_store %arg10[%c0_41, %c0_42], %51 {strides = array<i32>} : memref<2x1xf32, #tpu.memory_space<vmem>>, vector<2x1xf32>,
    return
  }
  func.func @transform_0(%arg0: i32) -> (i32, i32) {
    %c0_i32 = arith.constant 0 : i32
    %c0_i32_0 = arith.constant 0 : i32
    return %arg0, %c0_i32 : i32, i32
  }
  func.func @transform_1(%arg0: i32) -> (i32, i32) {
    %c0_i32 = arith.constant 0 : i32
    %c0_i32_0 = arith.constant 0 : i32
    return %arg0, %c0_i32 : i32, i32
  }
  func.func @transform_2(%arg0: i32) -> (i32, i32, i32) {
    %c0_i32 = arith.constant 0 : i32
    %c0_i32_0 = arith.constant 0 : i32
    %c0_i32_1 = arith.constant 0 : i32
    %c0_i32_2 = arith.constant 0 : i32
    return %c0_i32, %c0_i32_0, %c0_i32_1 : i32, i32, i32
  }
  func.func @transform_3(%arg0: i32) -> (i32, i32) {
    %c0_i32 = arith.constant 0 : i32
    %c0_i32_0 = arith.constant 0 : i32
    %c0_i32_1 = arith.constant 0 : i32
    return %c0_i32, %c0_i32_0 : i32, i32
  }
  func.func @transform_4(%arg0: i32) -> (i32, i32, i32) {
    %c0_i32 = arith.constant 0 : i32
    %c0_i32_0 = arith.constant 0 : i32
    %c0_i32_1 = arith.constant 0 : i32
    %c0_i32_2 = arith.constant 0 : i32
    return %c0_i32, %c0_i32_0, %c0_i32_1 : i32, i32, i32
  }
  func.func @transform_5(%arg0: i32) -> (i32, i32) {
    %c0_i32 = arith.constant 0 : i32
    %c0_i32_0 = arith.constant 0 : i32
    %c0_i32_1 = arith.constant 0 : i32
    return %c0_i32, %c0_i32_0 : i32, i32
  }
  func.func @transform_6(%arg0: i32) -> (i32, i32) {
    %c0_i32 = arith.constant 0 : i32
    %c0_i32_0 = arith.constant 0 : i32
    %c0_i32_1 = arith.constant 0 : i32
    return %c0_i32, %c0_i32_0 : i32, i32
  }
  func.func @transform_7(%arg0: i32) -> (i32, i32) {
    %c0_i32 = arith.constant 0 : i32
    %c0_i32_0 = arith.constant 0 : i32
    %c0_i32_1 = arith.constant 0 : i32
    return %c0_i32, %c0_i32_0 : i32, i32
  }
  func.func @transform_8(%arg0: i32) -> (i32, i32) {
    %c0_i32 = arith.constant 0 : i32
    %c0_i32_0 = arith.constant 0 : i32
    return %arg0, %c0_i32 : i32, i32
  }
  func.func @transform_9(%arg0: i32) -> (i32, i32) {
    %c0_i32 = arith.constant 0 : i32
    %c0_i32_0 = arith.constant 0 : i32
    return %arg0, %c0_i32 : i32, i32
  }
}

</mosaic_0001>

<llo_original>
// kernel: _lambda_.5
$region0: #{_lambda_.5}
  #allocation0 [shape = 'u32[]', space=smem, size = 0x4, offset = 0x4, fixed_abs, tag = 'smem constant byte address 0x4 - core index']
  #allocation1 [shape = 'u32[144,128]{1,0:T(1,128)}', space=vmem, size = 0x12000, scoped, tag = 'internal scratch']
  %s0 = inlined_call_operand.vmem [shape: f32[2,16], index: 0, kind: input, shape index: {}]
  %s1 = inlined_call_operand.vmem [shape: f32[2,4], index: 1, kind: input, shape index: {}]
  %s2 = inlined_call_operand.vmem [shape: f32[2,20,32], index: 2, kind: input, shape index: {}]
  %s3 = inlined_call_operand.vmem [shape: f32[2,32], index: 3, kind: input, shape index: {}]
  %s4 = inlined_call_operand.vmem [shape: f32[2,32,32], index: 4, kind: input, shape index: {}]
  %s5 = inlined_call_operand.vmem [shape: f32[2,32], index: 5, kind: input, shape index: {}]
  %s6 = inlined_call_operand.vmem [shape: f32[2,32], index: 6, kind: input, shape index: {}]
  %s7 = inlined_call_operand.vmem [shape: f32[2,1], index: 7, kind: input, shape index: {}]
  %s8 = inlined_call_operand.vmem [shape: f32[2,1], index: 8, kind: output, shape index: {0}]
  %s9 = inlined_call_operand.vmem [shape: f32[2,1], index: 9, kind: output, shape index: {1}]
  %10 = xla_tuple %s8, %s9
  %s11 = sld [smem:[#allocation0]]
  $region50: #{_lambda_.5} parent=0
    _
  %s13 = ssub.s32 1, %s11
  %s14 = scalar_select 0, %s13, %s11
  // Predicated region
  $region2: #{_lambda_.5} parent=0 // pred_check
    _
  $region3: #{_lambda_.5} parent=0 // pred_check_branch
    %16 = sbr.rel (0) target = $region5
  $region4: #{_lambda_.5} parent=0 // pred_region
    _
  $region5: #{_lambda_.5} parent=0 // pred_fallthru
    _
  // Predicated region
  $region6: #{_lambda_.5} parent=0 // pred_check
    _
  $region7: #{_lambda_.5} parent=0 // pred_check_branch
    %18 = sbr.rel (0) target = $region9
  $region8: #{_lambda_.5} parent=0 // pred_region
    _
  $region9: #{_lambda_.5} parent=0 // pred_fallthru
    _
  // Predicated region
  $region10: #{_lambda_.5} parent=0 // pred_check
    _
  $region11: #{_lambda_.5} parent=0 // pred_check_branch
    %20 = sbr.rel (0) target = $region13
  $region12: #{_lambda_.5} parent=0 // pred_region
    _
  $region13: #{_lambda_.5} parent=0 // pred_fallthru
    _
  // Predicated region
  $region14: #{_lambda_.5} parent=0 // pred_check
    _
  $region15: #{_lambda_.5} parent=0 // pred_check_branch
    %22 = sbr.rel (0) target = $region17
  $region16: #{_lambda_.5} parent=0 // pred_region
    _
  $region17: #{_lambda_.5} parent=0 // pred_fallthru
    _
  // Predicated region
  $region18: #{_lambda_.5} parent=0 // pred_check
    _
  $region19: #{_lambda_.5} parent=0 // pred_check_branch
    %24 = sbr.rel (0) target = $region21
  $region20: #{_lambda_.5} parent=0 // pred_region
    _
  $region21: #{_lambda_.5} parent=0 // pred_fallthru
    _
  // Predicated region
  $region22: #{_lambda_.5} parent=0 // pred_check
    _
  $region23: #{_lambda_.5} parent=0 // pred_check_branch
    %26 = sbr.rel (0) target = $region25
  $region24: #{_lambda_.5} parent=0 // pred_region
    _
  $region25: #{_lambda_.5} parent=0 // pred_fallthru
    _
  // Predicated region
  $region26: #{_lambda_.5} parent=0 // pred_check
    _
  $region27: #{_lambda_.5} parent=0 // pred_check_branch
    %28 = sbr.rel (0) target = $region29
  $region28: #{_lambda_.5} parent=0 // pred_region
    _
  $region29: #{_lambda_.5} parent=0 // pred_fallthru
    _
  // Predicated region
  $region30: #{_lambda_.5} parent=0 // pred_check
    _
  $region31: #{_lambda_.5} parent=0 // pred_check_branch
    %30 = sbr.rel (0) target = $region33
  $region32: #{_lambda_.5} parent=0 // pred_region
    _
  $region33: #{_lambda_.5} parent=0 // pred_fallthru
    _
  %v31 = vld [vmem:[%s0] sm:$0x3]
  %v32 = vld [vmem:[%s1] sm:$0x3]
  %34 = vrot.lane.b32.xlu0 %v32, 16
  %v35 = vpop.permute.xlu0 %34
  %vm37 = vcmask 130048
  %v38 = vsel %vm37, %v31, %v35
  %v39 = vld [vmem:[%s2] sm:$0xff]
  %v40 = vld [vmem:[%s2 + $0x8] sm:$0xff]
  %v41 = vld [vmem:[%s2 + $0x10] sm:$0xf]
  %v42 = vld [vmem:[%s3] sm:$0x1]
  %v43 = vlaneseq
  %v44 = vshrl.u32 %v43, 7
  %v45 = vsub.s32 0, %v44
  %v46 = vrot.slane %v42, %v45
  %vm47 = vcmask 162816
  %v49 = vsel %vm47, %v38, 0
  %vm51 = vcmask 1043456
  %v53 = vsel %vm51, %v41, 0
  %55 = vmatprep.subr.mxu0 0.0
  %56 = vmatpush1.msra.mxu0 %v39
  %57 = vmatprep.subr.mxu0 0.0
  %58 = vmatpush1.msra.mxu0 %v40
  %59 = vmatprep.subr.mxu0 0.0
  %60 = vmatpush1.msra.mxu0 %v53
  %61 = vmatprep.subr.mxu0 0.0
  %62 = vmatpush1.msra.mxu0 0.0
  %63 = vmatprep.subr.mxu0 0.0
  %64 = vmatpush1.msra.mxu0 0.0
  %65 = vmatprep.subr.mxu0 0.0
  %66 = vmatpush1.msra.mxu0 0.0
  %67 = vmatprep.subr.mxu0 0.0
  %68 = vmatpush1.msra.mxu0 0.0
  %69 = vmatprep.subr.mxu0 0.0
  %70 = vmatpush1.msra.mxu0 0.0
  %71 = vmatprep.subr.mxu0 0.0
  %72 = vmatpush1.msra.mxu0 0.0
  %73 = vmatprep.subr.mxu0 0.0
  %74 = vmatpush1.msra.mxu0 0.0
  %75 = vmatprep.subr.mxu0 0.0
  %76 = vmatpush1.msra.mxu0 0.0
  %77 = vmatprep.subr.mxu0 0.0
  %78 = vmatpush1.msra.mxu0 0.0
  %79 = vmatprep.subr.mxu0 0.0
  %80 = vmatpush1.msra.mxu0 0.0
  %81 = vmatprep.subr.mxu0 0.0
  %82 = vmatpush1.msra.mxu0 0.0
  %83 = vmatprep.subr.mxu0 0.0
  %84 = vmatpush1.msra.mxu0 0.0
  %85 = vmatprep.subr.mxu0 0.0
  %86 = vmatpush1.msra.mxu0 0.0
  %87 = vmatprep.subr.mxu0 0.0
  %88 = vmatpush1.msra.mxu0 0.0
  %89 = vmatprep.subr.mxu0 0.0
  %90 = vmatpush1.msra.mxu0 0.0
  %91 = vmatprep.subr.mxu0 0.0
  %92 = vmatpush1.msra.mxu0 0.0
  %93 = vmatprep.subr.mxu0 0.0
  %94 = vmatpush1.msra.mxu0 0.0
  %95 = vmatprep.subr.mxu0 0.0
  %96 = vmatpush1.msra.mxu0 0.0
  %97 = vmatprep.subr.mxu0 0.0
  %98 = vmatpush1.msra.mxu0 0.0
  %99 = vmatprep.subr.mxu0 0.0
  %100 = vmatpush1.msra.mxu0 0.0
  %101 = vmatprep.subr.mxu0 0.0
  %102 = vmatpush1.msra.mxu0 0.0
  %103 = vmatprep.subr.mxu0 0.0
  %104 = vmatpush1.msra.mxu0 0.0
  %105 = vmatprep.subr.mxu0 0.0
  %106 = vmatpush1.msra.mxu0 0.0
  %107 = vmatprep.subr.mxu0 0.0
  %108 = vmatpush1.msra.mxu0 0.0
  %109 = vmatprep.subr.mxu0 0.0
  %110 = vmatpush1.msra.mxu0 0.0
  %111 = vmatprep.subr.mxu0 0.0
  %112 = vmatpush1.msra.mxu0 0.0
  %113 = vmatprep.subr.mxu0 0.0
  %114 = vmatpush1.msra.mxu0 0.0
  %115 = vmatprep.subr.mxu0 0.0
  %116 = vmatpush1.msra.mxu0 0.0
  %117 = vmatprep.subr.mxu0 0.0
  %118 = vmatpush1.msra.mxu0 0.0
  %119 = vmatprep.mubr.f32.mxu0 0.0
  %120 = vmatmul.mubr.f32.gmra.mrb[0].mxu0 %v49
  %v121 = vpop.f32.mrb[0].mxu0
  %v122 = vadd.f32 %v46, %v121
  %v123 = vpop.f32.mrb[0].mxu0
  %124 = vdwg.mxu0
  %v125 = vmax.f32 %v122, 0.0
  %v126 = vld [vmem:[%s4] sm:$0xff]
  %v127 = vld [vmem:[%s4 + $0x8] sm:$0xff]
  %v128 = vld [vmem:[%s4 + $0x10] sm:$0xff]
  %v129 = vld [vmem:[%s4 + $0x18] sm:$0xff]
  %v130 = vld [vmem:[%s5] sm:$0x1]
  %v131 = vlaneseq
  %v132 = vshrl.u32 %v131, 7
  %v133 = vsub.s32 0, %v132
  %v134 = vrot.slane %v130, %v133
  %vm135 = vcmask 261120
  %v137 = vsel %vm135, %v125, 0
  %139 = vmatprep.subr.mxu0 0.0
  %140 = vmatpush1.msra.mxu0 %v126
  %141 = vmatprep.subr.mxu0 0.0
  %142 = vmatpush1.msra.mxu0 %v127
  %143 = vmatprep.subr.mxu0 0.0
  %144 = vmatpush1.msra.mxu0 %v128
  %145 = vmatprep.subr.mxu0 0.0
  %146 = vmatpush1.msra.mxu0 %v129
  %147 = vmatprep.subr.mxu0 0.0
  %148 = vmatpush1.msra.mxu0 0.0
  %149 = vmatprep.subr.mxu0 0.0
  %150 = vmatpush1.msra.mxu0 0.0
  %151 = vmatprep.subr.mxu0 0.0
  %152 = vmatpush1.msra.mxu0 0.0
  %153 = vmatprep.subr.mxu0 0.0
  %154 = vmatpush1.msra.mxu0 0.0
  %155 = vmatprep.subr.mxu0 0.0
  %156 = vmatpush1.msra.mxu0 0.0
  %157 = vmatprep.subr.mxu0 0.0
  %158 = vmatpush1.msra.mxu0 0.0
  %159 = vmatprep.subr.mxu0 0.0
  %160 = vmatpush1.msra.mxu0 0.0
  %161 = vmatprep.subr.mxu0 0.0
  %162 = vmatpush1.msra.mxu0 0.0
  %163 = vmatprep.subr.mxu0 0.0
  %164 = vmatpush1.msra.mxu0 0.0
  %165 = vmatprep.subr.mxu0 0.0
  %166 = vmatpush1.msra.mxu0 0.0
  %167 = vmatprep.subr.mxu0 0.0
  %168 = vmatpush1.msra.mxu0 0.0
  %169 = vmatprep.subr.mxu0 0.0
  %170 = vmatpush1.msra.mxu0 0.0
  %171 = vmatprep.subr.mxu0 0.0
  %172 = vmatpush1.msra.mxu0 0.0
  %173 = vmatprep.subr.mxu0 0.0
  %174 = vmatpush1.msra.mxu0 0.0
  %175 = vmatprep.subr.mxu0 0.0
  %176 = vmatpush1.msra.mxu0 0.0
  %177 = vmatprep.subr.mxu0 0.0
  %178 = vmatpush1.msra.mxu0 0.0
  %179 = vmatprep.subr.mxu0 0.0
  %180 = vmatpush1.msra.mxu0 0.0
  %181 = vmatprep.subr.mxu0 0.0
  %182 = vmatpush1.msra.mxu0 0.0
  %183 = vmatprep.subr.mxu0 0.0
  %184 = vmatpush1.msra.mxu0 0.0
  %185 = vmatprep.subr.mxu0 0.0
  %186 = vmatpush1.msra.mxu0 0.0
  %187 = vmatprep.subr.mxu0 0.0
  %188 = vmatpush1.msra.mxu0 0.0
  %189 = vmatprep.subr.mxu0 0.0
  %190 = vmatpush1.msra.mxu0 0.0
  %191 = vmatprep.subr.mxu0 0.0
  %192 = vmatpush1.msra.mxu0 0.0
  %193 = vmatprep.subr.mxu0 0.0
  %194 = vmatpush1.msra.mxu0 0.0
  %195 = vmatprep.subr.mxu0 0.0
  %196 = vmatpush1.msra.mxu0 0.0
  %197 = vmatprep.subr.mxu0 0.0
  %198 = vmatpush1.msra.mxu0 0.0
  %199 = vmatprep.subr.mxu0 0.0
  %200 = vmatpush1.msra.mxu0 0.0
  %201 = vmatprep.subr.mxu0 0.0
  %202 = vmatpush1.msra.mxu0 0.0
  %203 = vmatprep.mubr.f32.mxu0 0.0
  %204 = vmatmul.mubr.f32.gmra.mrb[0].mxu0 %v137
  %v205 = vpop.f32.mrb[0].mxu0
  %v206 = vadd.f32 %v134, %v205
  %v207 = vpop.f32.mrb[0].mxu0
  %208 = vdwg.mxu0
  %v209 = vmax.f32 %v206, 0.0
  %v210 = vld [vmem:[%s6] sm:$0x1]
  %v211 = vlaneseq
  %v212 = vshrl.u32 %v211, 7
  %v213 = vsub.s32 0, %v212
  %v214 = vrot.slane %v210, %v213
  %v215 = vmul.f32 %v209, %v214
  %vm216 = vcmask 254976
  %v217 = vsel %vm216, %v215, 0.0
  %218 = vadd.xlane.f32.xlu0 %v217
  %v219 = vpop.xlane.xlu0 %218
  %v220 = vld [vmem:[%s7] sm:$0x1]
  %v221 = vlaneseq
  %v222 = vshrl.u32 %v221, 7
  %v223 = vsub.s32 0, %v222
  %v224 = vrot.slane %v220, %v223
  %v225 = vadd.f32 %v219, %v224
  %vm226 = vcmask 1024
  %227 = vst.msk [vmem:[%s8] sm:$0x3] %vm226, %v225
  %s228 = scalar_lea.vmem %s2, 24
  %v229 = vld [vmem:[%s228] sm:$0xff]
  %v230 = vld [vmem:[%s228 + $0x8] sm:$0xff]
  %v231 = vld [vmem:[%s228 + $0x10] sm:$0xf]
  %v232 = vld [vmem:[%s3 + $0x1] sm:$0x1]
  %v233 = vlaneseq
  %v234 = vshrl.u32 %v233, 7
  %v235 = vsub.s32 0, %v234
  %v236 = vrot.slane %v232, %v235
  %v238 = vsel %vm51, %v231, 0
  %240 = vmatprep.subr.mxu0 0.0
  %241 = vmatpush1.msra.mxu0 %v229
  %242 = vmatprep.subr.mxu0 0.0
  %243 = vmatpush1.msra.mxu0 %v230
  %244 = vmatprep.subr.mxu0 0.0
  %245 = vmatpush1.msra.mxu0 %v238
  %246 = vmatprep.subr.mxu0 0.0
  %247 = vmatpush1.msra.mxu0 0.0
  %248 = vmatprep.subr.mxu0 0.0
  %249 = vmatpush1.msra.mxu0 0.0
  %250 = vmatprep.subr.mxu0 0.0
  %251 = vmatpush1.msra.mxu0 0.0
  %252 = vmatprep.subr.mxu0 0.0
  %253 = vmatpush1.msra.mxu0 0.0
  %254 = vmatprep.subr.mxu0 0.0
  %255 = vmatpush1.msra.mxu0 0.0
  %256 = vmatprep.subr.mxu0 0.0
  %257 = vmatpush1.msra.mxu0 0.0
  %258 = vmatprep.subr.mxu0 0.0
  %259 = vmatpush1.msra.mxu0 0.0
  %260 = vmatprep.subr.mxu0 0.0
  %261 = vmatpush1.msra.mxu0 0.0
  %262 = vmatprep.subr.mxu0 0.0
  %263 = vmatpush1.msra.mxu0 0.0
  %264 = vmatprep.subr.mxu0 0.0
  %265 = vmatpush1.msra.mxu0 0.0
  %266 = vmatprep.subr.mxu0 0.0
  %267 = vmatpush1.msra.mxu0 0.0
  %268 = vmatprep.subr.mxu0 0.0
  %269 = vmatpush1.msra.mxu0 0.0
  %270 = vmatprep.subr.mxu0 0.0
  %271 = vmatpush1.msra.mxu0 0.0
  %272 = vmatprep.subr.mxu0 0.0
  %273 = vmatpush1.msra.mxu0 0.0
  %274 = vmatprep.subr.mxu0 0.0
  %275 = vmatpush1.msra.mxu0 0.0
  %276 = vmatprep.subr.mxu0 0.0
  %277 = vmatpush1.msra.mxu0 0.0
  %278 = vmatprep.subr.mxu0 0.0
  %279 = vmatpush1.msra.mxu0 0.0
  %280 = vmatprep.subr.mxu0 0.0
  %281 = vmatpush1.msra.mxu0 0.0
  %282 = vmatprep.subr.mxu0 0.0
  %283 = vmatpush1.msra.mxu0 0.0
  %284 = vmatprep.subr.mxu0 0.0
  %285 = vmatpush1.msra.mxu0 0.0
  %286 = vmatprep.subr.mxu0 0.0
  %287 = vmatpush1.msra.mxu0 0.0
  %288 = vmatprep.subr.mxu0 0.0
  %289 = vmatpush1.msra.mxu0 0.0
  %290 = vmatprep.subr.mxu0 0.0
  %291 = vmatpush1.msra.mxu0 0.0
  %292 = vmatprep.subr.mxu0 0.0
  %293 = vmatpush1.msra.mxu0 0.0
  %294 = vmatprep.subr.mxu0 0.0
  %295 = vmatpush1.msra.mxu0 0.0
  %296 = vmatprep.subr.mxu0 0.0
  %297 = vmatpush1.msra.mxu0 0.0
  %298 = vmatprep.subr.mxu0 0.0
  %299 = vmatpush1.msra.mxu0 0.0
  %300 = vmatprep.subr.mxu0 0.0
  %301 = vmatpush1.msra.mxu0 0.0
  %302 = vmatprep.subr.mxu0 0.0
  %303 = vmatpush1.msra.mxu0 0.0
  %304 = vmatprep.mubr.f32.mxu0 0.0
  %305 = vmatmul.mubr.f32.gmra.mrb[0].mxu0 %v49
  %v306 = vpop.f32.mrb[0].mxu0
  %v307 = vadd.f32 %v236, %v306
  %v308 = vpop.f32.mrb[0].mxu0
  %309 = vdwg.mxu0
  %v310 = vmax.f32 %v307, 0.0
  %s311 = scalar_lea.vmem %s4, 32
  %v312 = vld [vmem:[%s311] sm:$0xff]
  %v313 = vld [vmem:[%s311 + $0x8] sm:$0xff]
  %v314 = vld [vmem:[%s311 + $0x10] sm:$0xff]
  %v315 = vld [vmem:[%s311 + $0x18] sm:$0xff]
  %v316 = vld [vmem:[%s5 + $0x1] sm:$0x1]
  %v317 = vlaneseq
  %v318 = vshrl.u32 %v317, 7
  %v319 = vsub.s32 0, %v318
  %v320 = vrot.slane %v316, %v319
  %v322 = vsel %vm135, %v310, 0
  %324 = vmatprep.subr.mxu0 0.0
  %325 = vmatpush1.msra.mxu0 %v312
  %326 = vmatprep.subr.mxu0 0.0
  %327 = vmatpush1.msra.mxu0 %v313
  %328 = vmatprep.subr.mxu0 0.0
  %329 = vmatpush1.msra.mxu0 %v314
  %330 = vmatprep.subr.mxu0 0.0
  %331 = vmatpush1.msra.mxu0 %v315
  %332 = vmatprep.subr.mxu0 0.0
  %333 = vmatpush1.msra.mxu0 0.0
  %334 = vmatprep.subr.mxu0 0.0
  %335 = vmatpush1.msra.mxu0 0.0
  %336 = vmatprep.subr.mxu0 0.0
  %337 = vmatpush1.msra.mxu0 0.0
  %338 = vmatprep.subr.mxu0 0.0
  %339 = vmatpush1.msra.mxu0 0.0
  %340 = vmatprep.subr.mxu0 0.0
  %341 = vmatpush1.msra.mxu0 0.0
  %342 = vmatprep.subr.mxu0 0.0
  %343 = vmatpush1.msra.mxu0 0.0
  %344 = vmatprep.subr.mxu0 0.0
  %345 = vmatpush1.msra.mxu0 0.0
  %346 = vmatprep.subr.mxu0 0.0
  %347 = vmatpush1.msra.mxu0 0.0
  %348 = vmatprep.subr.mxu0 0.0
  %349 = vmatpush1.msra.mxu0 0.0
  %350 = vmatprep.subr.mxu0 0.0
  %351 = vmatpush1.msra.mxu0 0.0
  %352 = vmatprep.subr.mxu0 0.0
  %353 = vmatpush1.msra.mxu0 0.0
  %354 = vmatprep.subr.mxu0 0.0
  %355 = vmatpush1.msra.mxu0 0.0
  %356 = vmatprep.subr.mxu0 0.0
  %357 = vmatpush1.msra.mxu0 0.0
  %358 = vmatprep.subr.mxu0 0.0
  %359 = vmatpush1.msra.mxu0 0.0
  %360 = vmatprep.subr.mxu0 0.0
  %361 = vmatpush1.msra.mxu0 0.0
  %362 = vmatprep.subr.mxu0 0.0
  %363 = vmatpush1.msra.mxu0 0.0
  %364 = vmatprep.subr.mxu0 0.0
  %365 = vmatpush1.msra.mxu0 0.0
  %366 = vmatprep.subr.mxu0 0.0
  %367 = vmatpush1.msra.mxu0 0.0
  %368 = vmatprep.subr.mxu0 0.0
  %369 = vmatpush1.msra.mxu0 0.0
  %370 = vmatprep.subr.mxu0 0.0
  %371 = vmatpush1.msra.mxu0 0.0
  %372 = vmatprep.subr.mxu0 0.0
  %373 = vmatpush1.msra.mxu0 0.0
  %374 = vmatprep.subr.mxu0 0.0
  %375 = vmatpush1.msra.mxu0 0.0
  %376 = vmatprep.subr.mxu0 0.0
  %377 = vmatpush1.msra.mxu0 0.0
  %378 = vmatprep.subr.mxu0 0.0
  %379 = vmatpush1.msra.mxu0 0.0
  %380 = vmatprep.subr.mxu0 0.0
  %381 = vmatpush1.msra.mxu0 0.0
  %382 = vmatprep.subr.mxu0 0.0
  %383 = vmatpush1.msra.mxu0 0.0
  %384 = vmatprep.subr.mxu0 0.0
  %385 = vmatpush1.msra.mxu0 0.0
  %386 = vmatprep.subr.mxu0 0.0
  %387 = vmatpush1.msra.mxu0 0.0
  %388 = vmatprep.mubr.f32.mxu0 0.0
  %389 = vmatmul.mubr.f32.gmra.mrb[0].mxu0 %v322
  %v390 = vpop.f32.mrb[0].mxu0
  %v391 = vadd.f32 %v320, %v390
  %v392 = vpop.f32.mrb[0].mxu0
  %393 = vdwg.mxu0
  %v394 = vmax.f32 %v391, 0.0
  %v395 = vld [vmem:[%s6 + $0x1] sm:$0x1]
  %v396 = vlaneseq
  %v397 = vshrl.u32 %v396, 7
  %v398 = vsub.s32 0, %v397
  %v399 = vrot.slane %v395, %v398
  %v400 = vmul.f32 %v394, %v399
  %v401 = vsel %vm216, %v400, 0.0
  %402 = vadd.xlane.f32.xlu0 %v401
  %v403 = vpop.xlane.xlu0 %402
  %v404 = vld [vmem:[%s7 + $0x1] sm:$0x1]
  %v405 = vlaneseq
  %v406 = vshrl.u32 %v405, 7
  %v407 = vsub.s32 0, %v406
  %v408 = vrot.slane %v404, %v407
  %v409 = vadd.f32 %v403, %v408
  %410 = vst.msk [vmem:[%s9] sm:$0x3] %vm226, %v409
  // Predicated region
  $region34: #{_lambda_.5} parent=0 // pred_check
    _
  $region35: #{_lambda_.5} parent=0 // pred_check_branch
    %412 = sbr.rel (0) target = $region37
  $region36: #{_lambda_.5} parent=0 // pred_region
    _
  $region37: #{_lambda_.5} parent=0 // pred_fallthru
    _
  // Predicated region
  $region38: #{_lambda_.5} parent=0 // pred_check
    _
  $region39: #{_lambda_.5} parent=0 // pred_check_branch
    %414 = sbr.rel (0) target = $region41
  $region40: #{_lambda_.5} parent=0 // pred_region
    _
  $region41: #{_lambda_.5} parent=0 // pred_fallthru
    _
  // Predicated region
  $region42: #{_lambda_.5} parent=0 // pred_check
    _
  $region43: #{_lambda_.5} parent=0 // pred_check_branch
    %416 = sbr.rel (0) target = $region45
  $region44: #{_lambda_.5} parent=0 // pred_region
    _
  $region45: #{_lambda_.5} parent=0 // pred_fallthru
    _
  // Predicated region
  $region46: #{_lambda_.5} parent=0 // pred_check
    _
  $region47: #{_lambda_.5} parent=0 // pred_check_branch
    %418 = sbr.rel (0) target = $region49
  $region48: #{_lambda_.5} parent=0 // pred_region
    _
  $region49: #{_lambda_.5} parent=0 // pred_fallthru
    _

// kernel: _lambda_.4
$region0: #{_lambda_.4}
  #allocation0 [shape = 'u32[]', space=smem, size = 0x4, offset = 0x4, fixed_abs, tag = 'smem constant byte address 0x4 - core index']
  #allocation1 [shape = 'u32[144,128]{1,0:T(1,128)}', space=vmem, size = 0x12000, scoped, tag = 'internal scratch']
  #allocation2 [shape = 'f32[2,16]{1,0:T(2,128)}', space=vmem, size = 0x400, scoped, tag = 'scratch operand']
  %s0 = inlined_call_operand.vmem [shape: bf16[2,280], index: 0, kind: input, shape index: {}]
  %s1 = inlined_call_operand.vmem [shape: bf16[280,16], index: 1, kind: input, shape index: {}]
  %s2 = inlined_call_operand.vmem [shape: f32[1,16], index: 2, kind: input, shape index: {}]
  %s3 = inlined_call_operand.vmem [shape: f32[1,16], index: 3, kind: input, shape index: {}]
  %s4 = inlined_call_operand.vmem [shape: f32[1,16], index: 4, kind: input, shape index: {}]
  %s5 = inlined_call_operand.vmem [shape: f32[2,16], index: 5, kind: output, shape index: {}]
  %s6 = sld [smem:[#allocation0]]
  $region38: #{_lambda_.4} parent=0
    _
  %s8 = ssub.s32 1, %s6
  %s9 = scalar_select 0, %s8, %s6
  // Predicated region
  $region2: #{_lambda_.4} parent=0 // pred_check
    _
  $region3: #{_lambda_.4} parent=0 // pred_check_branch
    %11 = sbr.rel (0) target = $region5
  $region4: #{_lambda_.4} parent=0 // pred_region
    _
  $region5: #{_lambda_.4} parent=0 // pred_fallthru
    _
  // Predicated region
  $region6: #{_lambda_.4} parent=0 // pred_check
    _
  $region7: #{_lambda_.4} parent=0 // pred_check_branch
    %13 = sbr.rel (0) target = $region9
  $region8: #{_lambda_.4} parent=0 // pred_region
    _
  $region9: #{_lambda_.4} parent=0 // pred_fallthru
    _
  // Predicated region
  $region10: #{_lambda_.4} parent=0 // pred_check
    _
  $region11: #{_lambda_.4} parent=0 // pred_check_branch
    %15 = sbr.rel (0) target = $region13
  $region12: #{_lambda_.4} parent=0 // pred_region
    _
  $region13: #{_lambda_.4} parent=0 // pred_fallthru
    _
  // Predicated region
  $region14: #{_lambda_.4} parent=0 // pred_check
    _
  $region15: #{_lambda_.4} parent=0 // pred_check_branch
    %17 = sbr.rel (0) target = $region17
  $region16: #{_lambda_.4} parent=0 // pred_region
    _
  $region17: #{_lambda_.4} parent=0 // pred_fallthru
    _
  // Predicated region
  $region18: #{_lambda_.4} parent=0 // pred_check
    _
  $region19: #{_lambda_.4} parent=0 // pred_check_branch
    %19 = sbr.rel (0) target = $region21
  $region20: #{_lambda_.4} parent=0 // pred_region
    _
  $region21: #{_lambda_.4} parent=0 // pred_fallthru
    _
  %p21 = scmp.eq.s32.totalorder 0, 0
  // Predicated region
  $region22: #{_lambda_.4} parent=0 // pred_check
    %p22 = pneg %p21
  $region23: #{_lambda_.4} parent=0 // pred_check_branch
    %24 = sbr.rel (%p22) target = $region25
  $region24: #{_lambda_.4} parent=0 // pred_region
    %vm25 = vcmask 123904
    %26 = vst.msk [vmem:[#allocation2] sm:$0x3] %vm25, 0.0
  $region25: #{_lambda_.4} parent=0 // pred_fallthru
    _
  %v27 = vld [vmem:[#allocation2] sm:$0x3]
  %v28 = vld [vmem:[%s0] sm:$0x7]
  %v29 = vld [vmem:[%s1] sm:$0xf]
  %v30 = vld [vmem:[%s1 + $0x4] sm:$0xf]
  %v31 = vld [vmem:[%s1 + $0x8] sm:$0xf]
  %v32 = vld [vmem:[%s1 + $0xc] sm:$0xf]
  %v33 = vld [vmem:[%s1 + $0x10] sm:$0xf]
  %v34 = vld [vmem:[%s1 + $0x14] sm:$0xf]
  %v35 = vld [vmem:[%s1 + $0x18] sm:$0xf]
  %v36 = vld [vmem:[%s1 + $0x1c] sm:$0xf]
  %v37 = vld [vmem:[%s1 + $0x20] sm:$0xf]
  %v38 = vld [vmem:[%s1 + $0x24] sm:$0xf]
  %v39 = vld [vmem:[%s1 + $0x28] sm:$0xf]
  %v40 = vld [vmem:[%s1 + $0x2c] sm:$0xf]
  %v41 = vld [vmem:[%s1 + $0x30] sm:$0xf]
  %v42 = vld [vmem:[%s1 + $0x34] sm:$0xf]
  %v43 = vld [vmem:[%s1 + $0x38] sm:$0xf]
  %v44 = vld [vmem:[%s1 + $0x3c] sm:$0xf]
  %v45 = vld [vmem:[%s1 + $0x40] sm:$0xf]
  %v46 = vld [vmem:[%s1 + $0x44] sm:$0xf]
  %v47 = vld [vmem:[%s1 + $0x48] sm:$0xf]
  %v48 = vld [vmem:[%s1 + $0x4c] sm:$0xf]
  %v49 = vld [vmem:[%s1 + $0x50] sm:$0xf]
  %v50 = vld [vmem:[%s1 + $0x54] sm:$0xf]
  %v51 = vld [vmem:[%s1 + $0x58] sm:$0xf]
  %v52 = vld [vmem:[%s1 + $0x5c] sm:$0xf]
  %v53 = vld [vmem:[%s1 + $0x60] sm:$0xf]
  %v54 = vld [vmem:[%s1 + $0x64] sm:$0xf]
  %v55 = vld [vmem:[%s1 + $0x68] sm:$0xf]
  %v56 = vld [vmem:[%s1 + $0x6c] sm:$0xf]
  %v57 = vld [vmem:[%s1 + $0x70] sm:$0xf]
  %v58 = vld [vmem:[%s1 + $0x74] sm:$0xf]
  %v59 = vld [vmem:[%s1 + $0x78] sm:$0xf]
  %v60 = vld [vmem:[%s1 + $0x7c] sm:$0xf]
  %v61 = vld [vmem:[%s1 + $0x80] sm:$0xf]
  %v62 = vld [vmem:[%s1 + $0x84] sm:$0xf]
  %v63 = vld [vmem:[%s1 + $0x88] sm:$0xf]
  %v66 = vunpack.c.l.s4 1966171168
  %v67 = vunpack.c.0.s8 %v66
  %v68 = vlaneseq
  %v69 = vshrl.u32 %v68, 7
  %v70 = vsub.s32 %v67, %v69
  %v71 = vrot.slane %v28, %v70
  %v72 = vcombine.high %v71, %v71
  %v74 = vunpack.c.l.s4 1966171168
  %v75 = vunpack.c.0.s8 %v74
  %v76 = vlaneseq
  %v77 = vshrl.u32 %v76, 7
  %v78 = vsub.s32 %v75, %v77
  %v79 = vrot.slane %v71, %v78
  %v81 = vunpack.c.l.s4 1966171168
  %v82 = vunpack.c.0.s8 %v81
  %v83 = vlaneseq
  %v84 = vshrl.u32 %v83, 7
  %v85 = vsub.s32 %v82, %v84
  %v86 = vrot.slane %v72, %v85
  %v87 = vcombine.high %v79, %v79
  %v125 = vunpack.c.l.b16 %v29
  %v126 = vunpack.c.l.b16 %v30
  %v127 = vunpack.c.l.b16 %v31
  %v128 = vunpack.c.l.b16 %v32
  %v129 = vunpack.c.l.b16 %v33
  %v130 = vunpack.c.l.b16 %v34
  %v131 = vunpack.c.l.b16 %v35
  %v132 = vunpack.c.l.b16 %v36
  %v133 = vunpack.c.l.b16 %v37
  %v134 = vunpack.c.l.b16 %v38
  %v135 = vunpack.c.l.b16 %v39
  %v136 = vunpack.c.l.b16 %v40
  %v137 = vunpack.c.l.b16 %v41
  %v138 = vunpack.c.l.b16 %v42
  %v139 = vunpack.c.l.b16 %v43
  %v140 = vunpack.c.l.b16 %v44
  %v141 = vunpack.c.l.b16 %v45
  %v142 = vunpack.c.l.b16 %v46
  %v143 = vunpack.c.l.b16 %v47
  %v144 = vunpack.c.l.b16 %v48
  %v145 = vunpack.c.l.b16 %v49
  %v146 = vunpack.c.l.b16 %v50
  %v147 = vunpack.c.l.b16 %v51
  %v148 = vunpack.c.l.b16 %v52
  %v149 = vunpack.c.l.b16 %v53
  %v150 = vunpack.c.l.b16 %v54
  %v151 = vunpack.c.l.b16 %v55
  %v152 = vunpack.c.l.b16 %v56
  %v153 = vunpack.c.l.b16 %v57
  %v154 = vunpack.c.l.b16 %v58
  %v155 = vunpack.c.l.b16 %v59
  %v156 = vunpack.c.l.b16 %v60
  %v157 = vunpack.c.l.b16 %v61
  %v158 = vunpack.c.l.b16 %v62
  %v159 = vunpack.c.l.b16 %v63
  %v160 = vpack.c.b16 %v126, %v125
  %v161 = vpack.c.b16 %v128, %v127
  %v162 = vpack.c.b16 %v130, %v129
  %v163 = vpack.c.b16 %v132, %v131
  %v164 = vpack.c.b16 %v134, %v133
  %v165 = vpack.c.b16 %v136, %v135
  %v166 = vpack.c.b16 %v138, %v137
  %v167 = vpack.c.b16 %v140, %v139
  %v168 = vpack.c.b16 %v142, %v141
  %v169 = vpack.c.b16 %v144, %v143
  %v170 = vpack.c.b16 %v146, %v145
  %v171 = vpack.c.b16 %v148, %v147
  %v172 = vpack.c.b16 %v150, %v149
  %v173 = vpack.c.b16 %v152, %v151
  %v174 = vpack.c.b16 %v154, %v153
  %v175 = vpack.c.b16 %v156, %v155
  %v176 = vpack.c.b16 %v158, %v157
  %v177 = vpack.c.b16 %v159, %v159
  %vm195 = vcmask 195584
  %v197 = vsel %vm195, %v87, 0
  %vm199 = vcmask 1043456
  %v201 = vsel %vm199, %v177, 0
  %203 = vmatprep.subr.bf16.mxu0 0
  %204 = vmatpush1.bf16.msra.mxu0 %v160
  %205 = vmatprep.subr.bf16.mxu0 0
  %206 = vmatpush1.bf16.msra.mxu0 %v161
  %207 = vmatprep.subr.bf16.mxu0 0
  %208 = vmatpush1.bf16.msra.mxu0 %v162
  %209 = vmatprep.subr.bf16.mxu0 0
  %210 = vmatpush1.bf16.msra.mxu0 %v163
  %211 = vmatprep.subr.bf16.mxu0 0
  %212 = vmatpush1.bf16.msra.mxu0 %v164
  %213 = vmatprep.subr.bf16.mxu0 0
  %214 = vmatpush1.bf16.msra.mxu0 %v165
  %215 = vmatprep.subr.bf16.mxu0 0
  %216 = vmatpush1.bf16.msra.mxu0 %v166
  %217 = vmatprep.subr.bf16.mxu0 0
  %218 = vmatpush1.bf16.msra.mxu0 %v167
  %219 = vmatprep.subr.bf16.mxu0 0
  %220 = vmatpush1.bf16.msra.mxu0 %v168
  %221 = vmatprep.subr.bf16.mxu0 0
  %222 = vmatpush1.bf16.msra.mxu0 %v169
  %223 = vmatprep.subr.bf16.mxu0 0
  %224 = vmatpush1.bf16.msra.mxu0 %v170
  %225 = vmatprep.subr.bf16.mxu0 0
  %226 = vmatpush1.bf16.msra.mxu0 %v171
  %227 = vmatprep.subr.bf16.mxu0 0
  %228 = vmatpush1.bf16.msra.mxu0 %v172
  %229 = vmatprep.subr.bf16.mxu0 0
  %230 = vmatpush1.bf16.msra.mxu0 %v173
  %231 = vmatprep.subr.bf16.mxu0 0
  %232 = vmatpush1.bf16.msra.mxu0 %v174
  %233 = vmatprep.subr.bf16.mxu0 0
  %234 = vmatpush1.bf16.msra.mxu0 %v175
  %235 = vmatprep.mubr.bf16.mxu0 %v86
  %236 = vmatmul.mubr.bf16.gmra.mrb[0].mxu0 %v79
  %v237 = vpop.f32.mrb[0].mxu0
  %v238 = vadd.f32 0.0, %v237
  %v239 = vpop.f32.mrb[0].mxu0
  %v240 = vpop.f32.mrb[0].mxu0
  %v241 = vpop.f32.mrb[0].mxu0
  %242 = vdwg.mxu0
  %243 = vmatprep.subr.bf16.mxu0 0
  %244 = vmatpush1.bf16.msra.mxu0 %v176
  %245 = vmatprep.subr.bf16.mxu0 0
  %246 = vmatpush1.bf16.msra.mxu0 %v201
  %247 = vmatprep.subr.bf16.mxu0 0
  %248 = vmatpush1.bf16.msra.mxu0 0
  %249 = vmatprep.subr.bf16.mxu0 0
  %250 = vmatpush1.bf16.msra.mxu0 0
  %251 = vmatprep.subr.bf16.mxu0 0
  %252 = vmatpush1.bf16.msra.mxu0 0
  %253 = vmatprep.subr.bf16.mxu0 0
  %254 = vmatpush1.bf16.msra.mxu0 0
  %255 = vmatprep.subr.bf16.mxu0 0
  %256 = vmatpush1.bf16.msra.mxu0 0
  %257 = vmatprep.subr.bf16.mxu0 0
  %258 = vmatpush1.bf16.msra.mxu0 0
  %259 = vmatprep.subr.bf16.mxu0 0
  %260 = vmatpush1.bf16.msra.mxu0 0
  %261 = vmatprep.subr.bf16.mxu0 0
  %262 = vmatpush1.bf16.msra.mxu0 0
  %263 = vmatprep.subr.bf16.mxu0 0
  %264 = vmatpush1.bf16.msra.mxu0 0
  %265 = vmatprep.subr.bf16.mxu0 0
  %266 = vmatpush1.bf16.msra.mxu0 0
  %267 = vmatprep.subr.bf16.mxu0 0
  %268 = vmatpush1.bf16.msra.mxu0 0
  %269 = vmatprep.subr.bf16.mxu0 0
  %270 = vmatpush1.bf16.msra.mxu0 0
  %271 = vmatprep.subr.bf16.mxu0 0
  %272 = vmatpush1.bf16.msra.mxu0 0
  %273 = vmatprep.subr.bf16.mxu0 0
  %274 = vmatpush1.bf16.msra.mxu0 0
  %275 = vmatprep.mubr.bf16.mxu0 0
  %276 = vmatmul.mubr.bf16.gmra.mrb[0].mxu0 %v197
  %v277 = vpop.f32.mrb[0].mxu0
  %v278 = vadd.f32 %v238, %v277
  %v279 = vpop.f32.mrb[0].mxu0
  %v280 = vpop.f32.mrb[0].mxu0
  %v281 = vpop.f32.mrb[0].mxu0
  %282 = vdwg.mxu0
  %v283 = vadd.f32 %v27, %v278
  %vm284 = vcmask 123904
  %285 = vst.msk [vmem:[#allocation2] sm:$0x3] %vm284, %v283
  // Predicated region
  $region26: #{_lambda_.4} parent=0 // pred_check
    %p286 = pneg %p21
  $region27: #{_lambda_.4} parent=0 // pred_check_branch
    %288 = sbr.rel (%p286) target = $region29
  $region28: #{_lambda_.4} parent=0 // pred_region
    %v289 = vld [vmem:[#allocation2] sm:$0x3]
    %v290 = vld [vmem:[%s2] sm:$0x1]
    %v292 = vlaneseq
    %v293 = vshrl.u32 %v292, 7
    %v294 = vsub.s32 0, %v293
    %v295 = vrot.slane %v290, %v294
    %v297 = vadd.f32 %v289, %v295
    %v298 = vsel %vm284, %v297, 0.0
    %299 = vadd.xlane.f32.xlu0 %v298
    %v300 = vpop.xlane.xlu0 %299
    %v301 = vrcp.pop 16.0
    %v302 = vmul.f32 %v300, %v301
    %v303 = vsub.f32 %v297, %v302
    %v304 = vmul.f32 %v303, %v303
    %v305 = vsel %vm284, %v304, 0.0
    %306 = vadd.xlane.f32.xlu0 %v305
    %v307 = vpop.xlane.xlu0 %306
    %v308 = vmul.f32 %v307, %v301
    %v309 = vadd.f32 %v308, 1e-05
    %v310 = vrsqrt.pop %v309
    %v311 = vmul.f32 %v303, %v310
    %v312 = vld [vmem:[%s3] sm:$0x1]
    %v314 = vlaneseq
    %v315 = vshrl.u32 %v314, 7
    %v316 = vsub.s32 0, %v315
    %v317 = vrot.slane %v312, %v316
    %v319 = vmul.f32 %v311, %v317
    %v320 = vld [vmem:[%s4] sm:$0x1]
    %v322 = vlaneseq
    %v323 = vshrl.u32 %v322, 7
    %v324 = vsub.s32 0, %v323
    %v325 = vrot.slane %v320, %v324
    %v327 = vadd.f32 %v319, %v325
    %328 = vst.msk [vmem:[%s5] sm:$0x3] %vm284, %v327
  $region29: #{_lambda_.4} parent=0 // pred_fallthru
    _
  // Predicated region
  $region30: #{_lambda_.4} parent=0 // pred_check
    _
  $region31: #{_lambda_.4} parent=0 // pred_check_branch
    %330 = sbr.rel (0) target = $region33
  $region32: #{_lambda_.4} parent=0 // pred_region
    _
  $region33: #{_lambda_.4} parent=0 // pred_fallthru
    _
  // Predicated region
  $region34: #{_lambda_.4} parent=0 // pred_check
    _
  $region35: #{_lambda_.4} parent=0 // pred_check_branch
    %332 = sbr.rel (0) target = $region37
  $region36: #{_lambda_.4} parent=0 // pred_region
    _
  $region37: #{_lambda_.4} parent=0 // pred_fallthru
    _

// kernel: _lambda_.3
$region0: #{_lambda_.3}
  #allocation0 [shape = 'u32[]', space=smem, size = 0x4, offset = 0x4, fixed_abs, tag = 'smem constant byte address 0x4 - core index']
  #allocation1 [shape = 'u32[144,128]{1,0:T(1,128)}', space=vmem, size = 0x12000, scoped, tag = 'internal scratch']
  #allocation2 [shape = 'f32[57,8]{1,0:T(8,128)}', space=vmem, size = 0x8000, scoped, tag = 'scratch operand']
  %s0 = inlined_call_operand.vmem [shape: f32[2,49,36], index: 0, kind: input, shape index: {}]
  %s1 = inlined_call_operand.vmem [shape: f32[36,8], index: 1, kind: input, shape index: {}]
  %s2 = inlined_call_operand.vmem [shape: f32[1,8], index: 2, kind: input, shape index: {}]
  %s3 = inlined_call_operand.vmem [shape: f32[72,8], index: 3, kind: input, shape index: {}]
  %s4 = inlined_call_operand.vmem [shape: f32[1,8], index: 4, kind: input, shape index: {}]
  %s5 = inlined_call_operand.vmem [shape: bf16[2,35,8], index: 5, kind: output, shape index: {}]
  %s6 = sld [smem:[#allocation0]]
  $region53: #{_lambda_.3} parent=0
    _
  %s8 = ssub.s32 1, %s6
  %s9 = scalar_select 0, %s8, %s6
  loop: start=0, step=1, limit=4
  $region2: #{_lambda_.3} parent=0 // loop_pre_header
    _
  $region3: #{_lambda_.3} parent=0 // loop_header
    %s11 = sphi 0, %s15
    %p12 = scmp.ge.s32.totalorder %s11, 4
    %s21 = sphi 0, %s23
    %s24 = sphi 0, %s21
    %s25 = sphi 0, %s24
    %s41 = sphi 0, %s25
    %s45 = sphi 0, %s45
    %s47 = sphi 0, %s45
    %s48 = sphi 0, %s47
    %s62 = sphi 0, %s48
    %s66 = sphi 0, %s66
    %s68 = sphi 0, %s66
    %s69 = sphi 0, %s68
    %s83 = sphi 0, %s69
    %s87 = sphi 0, %s87
    %s89 = sphi 0, %s87
    %s90 = sphi 0, %s89
    %s104 = sphi 0, %s90
    %s108 = sphi 0, %s108
    %s110 = sphi 0, %s108
    %s111 = sphi 0, %s110
    %s125 = sphi 0, %s111
    %s131 = sphi 0, %s133
    %s134 = sphi 0, %s131
    %s135 = sphi 0, %s134
    %s151 = sphi 0, %s135
  $region4: #{_lambda_.3} parent=0 // loop_header_branch
    %14 = sbr.rel (%p12) target = $region8
  $region5: #{_lambda_.3} parent=0 // loop_body
    %s16 = ssub.s32 %s11, 1
    %s17 = ssub.s32 %s11, 2
    %s18 = sadd.s32 %s11, 1
    %s19 = ssub.s32 %s11, %s18
    %p20 = scmp.eq.s32.totalorder %s19, 0
    %s22 = sadd.s32 %s21, 1
    %s23 = scalar_select %p20, %s21, %s22
    %p26 = pneg %p20
    %p27 = scmp.eq.s32.totalorder %s11, 1
    %p28 = por %p26, %p27
    %p29 = scmp.ne.s32.totalorder %s21, %s24
    %p30 = scmp.eq.s32.totalorder %s11, 0
    %p31 = por %p29, %p30
    %p32 = scmp.ne.s32.totalorder %s21, %s24
    %p33 = scmp.eq.s32.totalorder %s16, 1
    %p34 = por %p32, %p33
    %p35 = scmp.ne.s32.totalorder %s24, %s25
    %p36 = scmp.eq.s32.totalorder %s16, 0
    %p37 = por %p35, %p36
    %p38 = scmp.ne.s32.totalorder %s24, %s25
    %p39 = scmp.eq.s32.totalorder %s17, 1
    %p40 = por %p38, %p39
    %p42 = scmp.ne.s32.totalorder %s25, %s41
    %p43 = scmp.eq.s32.totalorder %s17, 0
    %p44 = por %p42, %p43
    %s46 = sadd.s32 %s45, 1
    %p49 = scmp.eq.s32.totalorder %s11, 1
    %p50 = scmp.ne.s32.totalorder %s45, %s47
    %p51 = scmp.eq.s32.totalorder %s11, 0
    %p52 = por %p50, %p51
    %p53 = scmp.ne.s32.totalorder %s45, %s47
    %p54 = scmp.eq.s32.totalorder %s16, 1
    %p55 = por %p53, %p54
    %p56 = scmp.ne.s32.totalorder %s47, %s48
    %p57 = scmp.eq.s32.totalorder %s16, 0
    %p58 = por %p56, %p57
    %p59 = scmp.ne.s32.totalorder %s47, %s48
    %p60 = scmp.eq.s32.totalorder %s17, 1
    %p61 = por %p59, %p60
    %p63 = scmp.ne.s32.totalorder %s48, %s62
    %p64 = scmp.eq.s32.totalorder %s17, 0
    %p65 = por %p63, %p64
    %s67 = sadd.s32 %s66, 1
    %p70 = scmp.eq.s32.totalorder %s11, 1
    %p71 = scmp.ne.s32.totalorder %s66, %s68
    %p72 = scmp.eq.s32.totalorder %s11, 0
    %p73 = por %p71, %p72
    %p74 = scmp.ne.s32.totalorder %s66, %s68
    %p75 = scmp.eq.s32.totalorder %s16, 1
    %p76 = por %p74, %p75
    %p77 = scmp.ne.s32.totalorder %s68, %s69
    %p78 = scmp.eq.s32.totalorder %s16, 0
    %p79 = por %p77, %p78
    %p80 = scmp.ne.s32.totalorder %s68, %s69
    %p81 = scmp.eq.s32.totalorder %s17, 1
    %p82 = por %p80, %p81
    %p84 = scmp.ne.s32.totalorder %s69, %s83
    %p85 = scmp.eq.s32.totalorder %s17, 0
    %p86 = por %p84, %p85
    %s88 = sadd.s32 %s87, 1
    %p91 = scmp.eq.s32.totalorder %s11, 1
    %p92 = scmp.ne.s32.totalorder %s87, %s89
    %p93 = scmp.eq.s32.totalorder %s11, 0
    %p94 = por %p92, %p93
    %p95 = scmp.ne.s32.totalorder %s87, %s89
    %p96 = scmp.eq.s32.totalorder %s16, 1
    %p97 = por %p95, %p96
    %p98 = scmp.ne.s32.totalorder %s89, %s90
    %p99 = scmp.eq.s32.totalorder %s16, 0
    %p100 = por %p98, %p99
    %p101 = scmp.ne.s32.totalorder %s89, %s90
    %p102 = scmp.eq.s32.totalorder %s17, 1
    %p103 = por %p101, %p102
    %p105 = scmp.ne.s32.totalorder %s90, %s104
    %p106 = scmp.eq.s32.totalorder %s17, 0
    %p107 = por %p105, %p106
    %s109 = sadd.s32 %s108, 1
    %p112 = scmp.eq.s32.totalorder %s11, 1
    %p113 = scmp.ne.s32.totalorder %s108, %s110
    %p114 = scmp.eq.s32.totalorder %s11, 0
    %p115 = por %p113, %p114
    %p116 = scmp.ne.s32.totalorder %s108, %s110
    %p117 = scmp.eq.s32.totalorder %s16, 1
    %p118 = por %p116, %p117
    %p119 = scmp.ne.s32.totalorder %s110, %s111
    %p120 = scmp.eq.s32.totalorder %s16, 0
    %p121 = por %p119, %p120
    %p122 = scmp.ne.s32.totalorder %s110, %s111
    %p123 = scmp.eq.s32.totalorder %s17, 1
    %p124 = por %p122, %p123
    %p126 = scmp.ne.s32.totalorder %s111, %s125
    %p127 = scmp.eq.s32.totalorder %s17, 0
    %p128 = por %p126, %p127
    %s129 = ssub.s32 %s11, %s18
    %p130 = scmp.eq.s32.totalorder %s129, 0
    %s132 = sadd.s32 %s131, 1
    %s133 = scalar_select %p130, %s131, %s132
    %p136 = pneg %p130
    %p137 = scmp.eq.s32.totalorder %s11, 1
    %p138 = por %p136, %p137
    %p139 = scmp.ne.s32.totalorder %s131, %s134
    %p140 = scmp.eq.s32.totalorder %s11, 0
    %p141 = por %p139, %p140
    %p142 = scmp.ne.s32.totalorder %s131, %s134
    %p143 = scmp.eq.s32.totalorder %s16, 1
    %p144 = por %p142, %p143
    %p145 = scmp.ne.s32.totalorder %s134, %s135
    %p146 = scmp.eq.s32.totalorder %s16, 0
    %p147 = por %p145, %p146
    %p148 = scmp.ne.s32.totalorder %s134, %s135
    %p149 = scmp.eq.s32.totalorder %s17, 1
    %p150 = por %p148, %p149
    %p152 = scmp.ne.s32.totalorder %s135, %s151
    %p153 = scmp.eq.s32.totalorder %s17, 0
    %p154 = por %p152, %p153
    %p155 = scmp.le.s32.totalorder 1, %s11
    %p156 = scmp.lt.s32.totalorder %s11, 3
    %p157 = pnand %p155, %p156
    %p158 = pneg %p157
    // Predicated region
    $region9: #{_lambda_.3} parent=5 // pred_check
      _
    $region10: #{_lambda_.3} parent=5 // pred_check_branch
      %160 = sbr.rel (%p157) target = $region12
    $region11: #{_lambda_.3} parent=5 // pred_region
      %s161 = ssub.s32 %s11, 1
      // Predicated region
      $region13: #{_lambda_.3} parent=11 // pred_check
        %p162 = pneg %p58
      $region14: #{_lambda_.3} parent=11 // pred_check_branch
        %164 = sbr.rel (%p162) target = $region16
      $region15: #{_lambda_.3} parent=11 // pred_region
        _
      $region16: #{_lambda_.3} parent=11 // pred_fallthru
        _
      // Predicated region
      $region17: #{_lambda_.3} parent=11 // pred_check
        %p165 = pneg %p79
      $region18: #{_lambda_.3} parent=11 // pred_check_branch
        %167 = sbr.rel (%p165) target = $region20
      $region19: #{_lambda_.3} parent=11 // pred_region
        _
      $region20: #{_lambda_.3} parent=11 // pred_fallthru
        _
      // Predicated region
      $region21: #{_lambda_.3} parent=11 // pred_check
        %p168 = pneg %p100
      $region22: #{_lambda_.3} parent=11 // pred_check_branch
        %170 = sbr.rel (%p168) target = $region24
      $region23: #{_lambda_.3} parent=11 // pred_region
        _
      $region24: #{_lambda_.3} parent=11 // pred_fallthru
        _
      // Predicated region
      $region25: #{_lambda_.3} parent=11 // pred_check
        %p171 = pneg %p121
      $region26: #{_lambda_.3} parent=11 // pred_check_branch
        %173 = sbr.rel (%p171) target = $region28
      $region27: #{_lambda_.3} parent=11 // pred_region
        _
      $region28: #{_lambda_.3} parent=11 // pred_fallthru
        _
    $region12: #{_lambda_.3} parent=5 // pred_fallthru
      _
    %p174 = scmp.lt.s32.totalorder %s11, 2
    // Predicated region
    $region29: #{_lambda_.3} parent=5 // pred_check
      %p175 = pneg %p174
    $region30: #{_lambda_.3} parent=5 // pred_check_branch
      %177 = sbr.rel (%p175) target = $region32
    $region31: #{_lambda_.3} parent=5 // pred_region
      // Predicated region
      $region33: #{_lambda_.3} parent=31 // pred_check
        %p178 = pneg %p31
      $region34: #{_lambda_.3} parent=31 // pred_check_branch
        %180 = sbr.rel (%p178) target = $region36
      $region35: #{_lambda_.3} parent=31 // pred_region
        %p181 = scmp.lt.s32.totalorder %s11, 1
        %s182 = scalar_select %p181, %s11, 1
        %s183 = smul.addr %s182, 7
        %s184 = smul.addr %s183, 8
        %s185 = scalar_lea.vmem %s0, %s184
      $region36: #{_lambda_.3} parent=31 // pred_fallthru
        _
    $region32: #{_lambda_.3} parent=5 // pred_fallthru
      _
    %p186 = scmp.le.s32.totalorder 1, %s11
    %p187 = scmp.lt.s32.totalorder %s11, 3
    %p188 = pnand %p186, %p187
    %p189 = pneg %p188
    // Predicated region
    $region37: #{_lambda_.3} parent=5 // pred_check
      _
    $region38: #{_lambda_.3} parent=5 // pred_check_branch
      %191 = sbr.rel (%p188) target = $region40
    $region39: #{_lambda_.3} parent=5 // pred_region
      %s192 = ssub.s32 %s11, 1
      %p193 = scmp.lt.s32.totalorder %s16, 1
      %s194 = scalar_select %p193, %s16, 1
      %s195 = smul.addr %s194, 7
      %s196 = smul.addr %s195, 8
      %s197 = scalar_lea.vmem %s0, %s196
      %p198 = pneg %p37
      %p199 = pneg %p34
      %p200 = pneg %p58
      %p201 = pneg %p55
      %p202 = pneg %p79
      %p203 = pneg %p76
      %p204 = pneg %p100
      %p205 = pneg %p97
      %p206 = pneg %p121
      %p207 = pneg %p118
      %p208 = pneg %p147
      %p209 = pneg %p144
      %p210 = scmp.lt.s32.totalorder %s16, 1
      %s211 = scalar_select %p210, %s16, 1
      %s212 = smul.addr %s211, 5
      %s213 = smul.addr %s212, 4
      %s214 = scalar_lea.vmem %s5, %s213
      %p215 = scmp.lt.s32.totalorder %s16, 1
      %s216 = scalar_select %p215, %s16, 1
      %s217 = smul.addr %s216, 7
      %s218 = smul.addr %s217, 8
      %s219 = scalar_lea.vmem %s0, %s218
      %p220 = scmp.lt.s32.totalorder %s16, 1
      %s221 = scalar_select %p220, %s16, 1
      %s222 = smul.addr %s221, 5
      %s223 = smul.addr %s222, 4
      %s224 = scalar_lea.vmem %s5, %s223
      %v225 = vld [vmem:[%s1] sm:$0xff]
      %v226 = vld [vmem:[%s1 + $0x8] sm:$0xff]
      %v227 = vld [vmem:[%s1 + $0x10] sm:$0xff]
      %v228 = vld [vmem:[%s1 + $0x18] sm:$0xff]
      %v229 = vld [vmem:[%s1 + $0x20] sm:$0xf]
      %v230 = vld [vmem:[%s2] sm:$0x1]
      %v231 = vld [vmem:[%s219] sm:$0xff]
      %v232 = vld [vmem:[%s219 + $0x8] sm:$0xff]
      %v233 = vld [vmem:[%s219 + $0x10] sm:$0xff]
      %v234 = vld [vmem:[%s219 + $0x18] sm:$0xff]
      %v235 = vld [vmem:[%s219 + $0x20] sm:$0xff]
      %v236 = vld [vmem:[%s219 + $0x28] sm:$0xff]
      %v237 = vld [vmem:[%s219 + $0x30] sm:$0x1]
      %v239 = vlaneseq
      %v240 = vshrl.u32 %v239, 7
      %v241 = vsub.s32 0, %v240
      %v242 = vrot.slane %v230, %v241
      %vm244 = vcmask 293888
      %v246 = vsel %vm244, %v231, 0
      %v249 = vsel %vm244, %v232, 0
      %v252 = vsel %vm244, %v233, 0
      %v255 = vsel %vm244, %v234, 0
      %v258 = vsel %vm244, %v235, 0
      %v261 = vsel %vm244, %v236, 0
      %v264 = vsel %vm244, %v237, 0
      %vm266 = vcmask 1043456
      %v268 = vsel %vm266, %v229, 0
      %270 = vmatprep.subr.mxu0 0.0
      %271 = vmatpush1.msra.mxu0 %v225
      %272 = vmatprep.subr.mxu0 0.0
      %273 = vmatpush1.msra.mxu0 %v226
      %274 = vmatprep.subr.mxu0 0.0
      %275 = vmatpush1.msra.mxu0 %v227
      %276 = vmatprep.subr.mxu0 0.0
      %277 = vmatpush1.msra.mxu0 %v228
      %278 = vmatprep.subr.mxu0 0.0
      %279 = vmatpush1.msra.mxu0 %v268
      %280 = vmatprep.subr.mxu0 0.0
      %281 = vmatpush1.msra.mxu0 0.0
      %282 = vmatprep.subr.mxu0 0.0
      %283 = vmatpush1.msra.mxu0 0.0
      %284 = vmatprep.subr.mxu0 0.0
      %285 = vmatpush1.msra.mxu0 0.0
      %286 = vmatprep.subr.mxu0 0.0
      %287 = vmatpush1.msra.mxu0 0.0
      %288 = vmatprep.subr.mxu0 0.0
      %289 = vmatpush1.msra.mxu0 0.0
      %290 = vmatprep.subr.mxu0 0.0
      %291 = vmatpush1.msra.mxu0 0.0
      %292 = vmatprep.subr.mxu0 0.0
      %293 = vmatpush1.msra.mxu0 0.0
      %294 = vmatprep.subr.mxu0 0.0
      %295 = vmatpush1.msra.mxu0 0.0
      %296 = vmatprep.subr.mxu0 0.0
      %297 = vmatpush1.msra.mxu0 0.0
      %298 = vmatprep.subr.mxu0 0.0
      %299 = vmatpush1.msra.mxu0 0.0
      %300 = vmatprep.subr.mxu0 0.0
      %301 = vmatpush1.msra.mxu0 0.0
      %302 = vmatprep.subr.mxu0 0.0
      %303 = vmatpush1.msra.mxu0 0.0
      %304 = vmatprep.subr.mxu0 0.0
      %305 = vmatpush1.msra.mxu0 0.0
      %306 = vmatprep.subr.mxu0 0.0
      %307 = vmatpush1.msra.mxu0 0.0
      %308 = vmatprep.subr.mxu0 0.0
      %309 = vmatpush1.msra.mxu0 0.0
      %310 = vmatprep.subr.mxu0 0.0
      %311 = vmatpush1.msra.mxu0 0.0
      %312 = vmatprep.subr.mxu0 0.0
      %313 = vmatpush1.msra.mxu0 0.0
      %314 = vmatprep.subr.mxu0 0.0
      %315 = vmatpush1.msra.mxu0 0.0
      %316 = vmatprep.subr.mxu0 0.0
      %317 = vmatpush1.msra.mxu0 0.0
      %318 = vmatprep.subr.mxu0 0.0
      %319 = vmatpush1.msra.mxu0 0.0
      %320 = vmatprep.subr.mxu0 0.0
      %321 = vmatpush1.msra.mxu0 0.0
      %322 = vmatprep.subr.mxu0 0.0
      %323 = vmatpush1.msra.mxu0 0.0
      %324 = vmatprep.subr.mxu0 0.0
      %325 = vmatpush1.msra.mxu0 0.0
      %326 = vmatprep.subr.mxu0 0.0
      %327 = vmatpush1.msra.mxu0 0.0
      %328 = vmatprep.subr.mxu0 0.0
      %329 = vmatpush1.msra.mxu0 0.0
      %330 = vmatprep.subr.mxu0 0.0
      %331 = vmatpush1.msra.mxu0 0.0
      %332 = vmatprep.subr.mxu0 0.0
      %333 = vmatpush1.msra.mxu0 0.0
      %334 = vmatprep.mubr.f32.mxu0 0.0
      %335 = vmatmul.mubr.f32.gmra.mrb[0].mxu0 %v246
      %v336 = vpop.f32.mrb[0].mxu0
      %v337 = vadd.f32 %v242, %v336
      %v338 = vpop.f32.mrb[0].mxu0
      %339 = vmatprep.mubr.f32.mxu0 0.0
      %340 = vmatmul.mubr.f32.gmra.mrb[0].mxu0 %v249
      %v341 = vpop.f32.mrb[0].mxu0
      %v342 = vadd.f32 %v242, %v341
      %v343 = vpop.f32.mrb[0].mxu0
      %344 = vmatprep.mubr.f32.mxu0 0.0
      %345 = vmatmul.mubr.f32.gmra.mrb[0].mxu0 %v252
      %v346 = vpop.f32.mrb[0].mxu0
      %v347 = vadd.f32 %v242, %v346
      %v348 = vpop.f32.mrb[0].mxu0
      %349 = vmatprep.mubr.f32.mxu0 0.0
      %350 = vmatmul.mubr.f32.gmra.mrb[0].mxu0 %v255
      %v351 = vpop.f32.mrb[0].mxu0
      %v352 = vadd.f32 %v242, %v351
      %v353 = vpop.f32.mrb[0].mxu0
      %354 = vmatprep.mubr.f32.mxu0 0.0
      %355 = vmatmul.mubr.f32.gmra.mrb[0].mxu0 %v258
      %v356 = vpop.f32.mrb[0].mxu0
      %v357 = vadd.f32 %v242, %v356
      %v358 = vpop.f32.mrb[0].mxu0
      %359 = vmatprep.mubr.f32.mxu0 0.0
      %360 = vmatmul.mubr.f32.gmra.mrb[0].mxu0 %v261
      %v361 = vpop.f32.mrb[0].mxu0
      %v362 = vadd.f32 %v242, %v361
      %v363 = vpop.f32.mrb[0].mxu0
      %364 = vmatprep.mubr.f32.mxu0 0.0
      %365 = vmatmul.mubr.f32.gmra.mrb[0].mxu0 %v264
      %v366 = vpop.f32.mrb[0].mxu0
      %v367 = vadd.f32 %v242, %v366
      %v368 = vpop.f32.mrb[0].mxu0
      %369 = vdwg.mxu0
      %v370 = vmax.f32 %v337, 0.0
      %v371 = vmax.f32 %v342, 0.0
      %v372 = vmax.f32 %v347, 0.0
      %v373 = vmax.f32 %v352, 0.0
      %v374 = vmax.f32 %v357, 0.0
      %v375 = vmax.f32 %v362, 0.0
      %v376 = vmax.f32 %v367, 0.0
      %vm377 = vcmask 64512
      %378 = vst.msk [vmem:[#allocation2] sm:$0xff] %vm377, %v370
      %379 = vst.msk [vmem:[#allocation2 + $0x8] sm:$0xff] %vm377, %v371
      %380 = vst.msk [vmem:[#allocation2 + $0x10] sm:$0xff] %vm377, %v372
      %381 = vst.msk [vmem:[#allocation2 + $0x18] sm:$0xff] %vm377, %v373
      %382 = vst.msk [vmem:[#allocation2 + $0x20] sm:$0xff] %vm377, %v374
      %383 = vst.msk [vmem:[#allocation2 + $0x28] sm:$0xff] %vm377, %v375
      %vm384 = vcmask 57344
      %385 = vst.msk [vmem:[#allocation2 + $0x30] sm:$0x1] %vm384, %v376
      %386 = vst.msk [vmem:[#allocation2 + $0x31] sm:$0xff] %vm377, 0.0
      %v387 = vld [vmem:[%s3] sm:$0xff]
      %v388 = vld [vmem:[%s3 + $0x8] sm:$0xff]
      %v389 = vld [vmem:[%s3 + $0x10] sm:$0xff]
      %v390 = vld [vmem:[%s3 + $0x18] sm:$0xff]
      %v391 = vld [vmem:[%s3 + $0x20] sm:$0xff]
      %v392 = vld [vmem:[%s3 + $0x28] sm:$0xff]
      %v393 = vld [vmem:[%s3 + $0x30] sm:$0xff]
      %v394 = vld [vmem:[%s3 + $0x38] sm:$0xff]
      %v395 = vld [vmem:[%s3 + $0x40] sm:$0xff]
      %v396 = vld [vmem:[%s4] sm:$0x1]
      %v397 = vld [vmem:[#allocation2] sm:$0xff]
      %v398 = vld [vmem:[#allocation2 + $0x8] sm:$0xff]
      %v399 = vld [vmem:[#allocation2 + $0x10] sm:$0xff]
      %v400 = vld [vmem:[#allocation2 + $0x18] sm:$0xff]
      %v401 = vld [vmem:[#allocation2 + $0x20] sm:$0x7]
      %v402 = vld [vmem:[#allocation2 + $0x1] sm:$0xff]
      %v403 = vld [vmem:[#allocation2 + $0x9] sm:$0xff]
      %v404 = vld [vmem:[#allocation2 + $0x11] sm:$0xff]
      %v405 = vld [vmem:[#allocation2 + $0x19] sm:$0xff]
      %v406 = vld [vmem:[#allocation2 + $0x21] sm:$0x7]
      %v407 = vld [vmem:[#allocation2 + $0x2] sm:$0xff]
      %v408 = vld [vmem:[#allocation2 + $0xa] sm:$0xff]
      %v409 = vld [vmem:[#allocation2 + $0x12] sm:$0xff]
      %v410 = vld [vmem:[#allocation2 + $0x1a] sm:$0xff]
      %v411 = vld [vmem:[#allocation2 + $0x22] sm:$0x7]
      %v412 = vld [vmem:[#allocation2 + $0x7] sm:$0xff]
      %v413 = vld [vmem:[#allocation2 + $0xf] sm:$0xff]
      %v414 = vld [vmem:[#allocation2 + $0x17] sm:$0xff]
      %v415 = vld [vmem:[#allocation2 + $0x1f] sm:$0xff]
      %v416 = vld [vmem:[#allocation2 + $0x27] sm:$0x7]
      %v417 = vld [vmem:[#allocation2 + $0x20] sm:$0xff]
      %v418 = vld [vmem:[#allocation2 + $0x28] sm:$0x7]
      %v419 = vld [vmem:[#allocation2 + $0x21] sm:$0xff]
      %v420 = vld [vmem:[#allocation2 + $0x29] sm:$0x7]
      %v421 = vld [vmem:[#allocation2 + $0xe] sm:$0xff]
      %v422 = vld [vmem:[#allocation2 + $0x16] sm:$0xff]
      %v423 = vld [vmem:[#allocation2 + $0x1e] sm:$0xff]
      %v424 = vld [vmem:[#allocation2 + $0x26] sm:$0xff]
      %v425 = vld [vmem:[#allocation2 + $0x2e] sm:$0x7]
      %v426 = vld [vmem:[#allocation2 + $0x27] sm:$0xff]
      %v427 = vld [vmem:[#allocation2 + $0x2f] sm:$0x7]
      %v428 = vld [vmem:[#allocation2 + $0x28] sm:$0xff]
      %v429 = vld [vmem:[#allocation2 + $0x30] sm:$0x7]
      %435 = vrot.lane.b32.xlu0 %v402, 8
      %v436 = vpop.permute.xlu0 %435
      %437 = vrot.lane.b32.xlu0 %v403, 8
      %v438 = vpop.permute.xlu0 %437
      %439 = vrot.lane.b32.xlu0 %v404, 8
      %v440 = vpop.permute.xlu0 %439
      %441 = vrot.lane.b32.xlu0 %v405, 8
      %v442 = vpop.permute.xlu0 %441
      %443 = vrot.lane.b32.xlu0 %v406, 8
      %v444 = vpop.permute.xlu0 %443
      %455 = vrot.lane.b32.xlu0 %v407, 16
      %v456 = vpop.permute.xlu0 %455
      %457 = vrot.lane.b32.xlu0 %v408, 16
      %v458 = vpop.permute.xlu0 %457
      %459 = vrot.lane.b32.xlu0 %v409, 16
      %v460 = vpop.permute.xlu0 %459
      %461 = vrot.lane.b32.xlu0 %v410, 16
      %v462 = vpop.permute.xlu0 %461
      %463 = vrot.lane.b32.xlu0 %v411, 16
      %v464 = vpop.permute.xlu0 %463
      %475 = vrot.lane.b32.xlu0 %v412, 24
      %v476 = vpop.permute.xlu0 %475
      %477 = vrot.lane.b32.xlu0 %v413, 24
      %v478 = vpop.permute.xlu0 %477
      %479 = vrot.lane.b32.xlu0 %v414, 24
      %v480 = vpop.permute.xlu0 %479
      %481 = vrot.lane.b32.xlu0 %v415, 24
      %v482 = vpop.permute.xlu0 %481
      %483 = vrot.lane.b32.xlu0 %v416, 24
      %v484 = vpop.permute.xlu0 %483
      %495 = vrot.lane.b32.xlu0 %v398, 32
      %v496 = vpop.permute.xlu0 %495
      %497 = vrot.lane.b32.xlu0 %v399, 32
      %v498 = vpop.permute.xlu0 %497
      %499 = vrot.lane.b32.xlu0 %v400, 32
      %v500 = vpop.permute.xlu0 %499
      %501 = vrot.lane.b32.xlu0 %v417, 32
      %v502 = vpop.permute.xlu0 %501
      %503 = vrot.lane.b32.xlu0 %v418, 32
      %v504 = vpop.permute.xlu0 %503
      %512 = vrot.lane.b32.xlu0 %v403, 40
      %v513 = vpop.permute.xlu0 %512
      %514 = vrot.lane.b32.xlu0 %v404, 40
      %v515 = vpop.permute.xlu0 %514
      %516 = vrot.lane.b32.xlu0 %v405, 40
      %v517 = vpop.permute.xlu0 %516
      %518 = vrot.lane.b32.xlu0 %v419, 40
      %v519 = vpop.permute.xlu0 %518
      %520 = vrot.lane.b32.xlu0 %v420, 40
      %v521 = vpop.permute.xlu0 %520
      %532 = vrot.lane.b32.xlu0 %v421, 48
      %v533 = vpop.permute.xlu0 %532
      %534 = vrot.lane.b32.xlu0 %v422, 48
      %v535 = vpop.permute.xlu0 %534
      %536 = vrot.lane.b32.xlu0 %v423, 48
      %v537 = vpop.permute.xlu0 %536
      %538 = vrot.lane.b32.xlu0 %v424, 48
      %v539 = vpop.permute.xlu0 %538
      %540 = vrot.lane.b32.xlu0 %v425, 48
      %v541 = vpop.permute.xlu0 %540
      %549 = vrot.lane.b32.xlu0 %v413, 56
      %v550 = vpop.permute.xlu0 %549
      %551 = vrot.lane.b32.xlu0 %v414, 56
      %v552 = vpop.permute.xlu0 %551
      %553 = vrot.lane.b32.xlu0 %v415, 56
      %v554 = vpop.permute.xlu0 %553
      %555 = vrot.lane.b32.xlu0 %v426, 56
      %v556 = vpop.permute.xlu0 %555
      %557 = vrot.lane.b32.xlu0 %v427, 56
      %v558 = vpop.permute.xlu0 %557
      %566 = vrot.lane.b32.xlu0 %v399, 64
      %v567 = vpop.permute.xlu0 %566
      %568 = vrot.lane.b32.xlu0 %v400, 64
      %v569 = vpop.permute.xlu0 %568
      %570 = vrot.lane.b32.xlu0 %v417, 64
      %v571 = vpop.permute.xlu0 %570
      %572 = vrot.lane.b32.xlu0 %v428, 64
      %v573 = vpop.permute.xlu0 %572
      %574 = vrot.lane.b32.xlu0 %v429, 64
      %v575 = vpop.permute.xlu0 %574
      %v581 = vsel %vm377, %v397, %v436
      %v582 = vsel %vm377, %v398, %v438
      %v583 = vsel %vm377, %v399, %v440
      %v584 = vsel %vm377, %v400, %v442
      %v585 = vsel %vm377, %v401, %v444
      %vm586 = vcmask 130048
      %v587 = vsel %vm586, %v581, %v456
      %v588 = vsel %vm586, %v582, %v458
      %v589 = vsel %vm586, %v583, %v460
      %v590 = vsel %vm586, %v584, %v462
      %v591 = vsel %vm586, %v585, %v464
      %vm592 = vcmask 195584
      %v593 = vsel %vm592, %v587, %v476
      %v594 = vsel %vm592, %v588, %v478
      %v595 = vsel %vm592, %v589, %v480
      %v596 = vsel %vm592, %v590, %v482
      %v597 = vsel %vm592, %v591, %v484
      %vm598 = vcmask 261120
      %v599 = vsel %vm598, %v593, %v496
      %v600 = vsel %vm598, %v594, %v498
      %v601 = vsel %vm598, %v595, %v500
      %v602 = vsel %vm598, %v596, %v502
      %v603 = vsel %vm598, %v597, %v504
      %vm604 = vcmask 326656
      %v605 = vsel %vm604, %v599, %v513
      %v606 = vsel %vm604, %v600, %v515
      %v607 = vsel %vm604, %v601, %v517
      %v608 = vsel %vm604, %v602, %v519
      %v609 = vsel %vm604, %v603, %v521
      %vm610 = vcmask 392192
      %v611 = vsel %vm610, %v605, %v533
      %v612 = vsel %vm610, %v606, %v535
      %v613 = vsel %vm610, %v607, %v537
      %v614 = vsel %vm610, %v608, %v539
      %v615 = vsel %vm610, %v609, %v541
      %vm616 = vcmask 457728
      %v617 = vsel %vm616, %v611, %v550
      %v618 = vsel %vm616, %v612, %v552
      %v619 = vsel %vm616, %v613, %v554
      %v620 = vsel %vm616, %v614, %v556
      %v621 = vsel %vm616, %v615, %v558
      %vm622 = vcmask 523264
      %v623 = vsel %vm622, %v617, %v567
      %v624 = vsel %vm622, %v618, %v569
      %v625 = vsel %vm622, %v619, %v571
      %v626 = vsel %vm622, %v620, %v573
      %v627 = vsel %vm622, %v621, %v575
      %v629 = vlaneseq
      %v630 = vshrl.u32 %v629, 7
      %v631 = vsub.s32 0, %v630
      %v632 = vrot.slane %v396, %v631
      %vm634 = vcmask 588800
      %v636 = vsel %vm634, %v623, 0
      %v639 = vsel %vm634, %v624, 0
      %v642 = vsel %vm634, %v625, 0
      %v645 = vsel %vm634, %v626, 0
      %v648 = vsel %vm634, %v627, 0
      %650 = vmatprep.subr.mxu0 0.0
      %651 = vmatpush1.msra.mxu0 %v387
      %652 = vmatprep.subr.mxu0 0.0
      %653 = vmatpush1.msra.mxu0 %v388
      %654 = vmatprep.subr.mxu0 0.0
      %655 = vmatpush1.msra.mxu0 %v389
      %656 = vmatprep.subr.mxu0 0.0
      %657 = vmatpush1.msra.mxu0 %v390
      %658 = vmatprep.subr.mxu0 0.0
      %659 = vmatpush1.msra.mxu0 %v391
      %660 = vmatprep.subr.mxu0 0.0
      %661 = vmatpush1.msra.mxu0 %v392
      %662 = vmatprep.subr.mxu0 0.0
      %663 = vmatpush1.msra.mxu0 %v393
      %664 = vmatprep.subr.mxu0 0.0
      %665 = vmatpush1.msra.mxu0 %v394
      %666 = vmatprep.subr.mxu0 0.0
      %667 = vmatpush1.msra.mxu0 %v395
      %668 = vmatprep.subr.mxu0 0.0
      %669 = vmatpush1.msra.mxu0 0.0
      %670 = vmatprep.subr.mxu0 0.0
      %671 = vmatpush1.msra.mxu0 0.0
      %672 = vmatprep.subr.mxu0 0.0
      %673 = vmatpush1.msra.mxu0 0.0
      %674 = vmatprep.subr.mxu0 0.0
      %675 = vmatpush1.msra.mxu0 0.0
      %676 = vmatprep.subr.mxu0 0.0
      %677 = vmatpush1.msra.mxu0 0.0
      %678 = vmatprep.subr.mxu0 0.0
      %679 = vmatpush1.msra.mxu0 0.0
      %680 = vmatprep.subr.mxu0 0.0
      %681 = vmatpush1.msra.mxu0 0.0
      %682 = vmatprep.subr.mxu0 0.0
      %683 = vmatpush1.msra.mxu0 0.0
      %684 = vmatprep.subr.mxu0 0.0
      %685 = vmatpush1.msra.mxu0 0.0
      %686 = vmatprep.subr.mxu0 0.0
      %687 = vmatpush1.msra.mxu0 0.0
      %688 = vmatprep.subr.mxu0 0.0
      %689 = vmatpush1.msra.mxu0 0.0
      %690 = vmatprep.subr.mxu0 0.0
      %691 = vmatpush1.msra.mxu0 0.0
      %692 = vmatprep.subr.mxu0 0.0
      %693 = vmatpush1.msra.mxu0 0.0
      %694 = vmatprep.subr.mxu0 0.0
      %695 = vmatpush1.msra.mxu0 0.0
      %696 = vmatprep.subr.mxu0 0.0
      %697 = vmatpush1.msra.mxu0 0.0
      %698 = vmatprep.subr.mxu0 0.0
      %699 = vmatpush1.msra.mxu0 0.0
      %700 = vmatprep.subr.mxu0 0.0
      %701 = vmatpush1.msra.mxu0 0.0
      %702 = vmatprep.subr.mxu0 0.0
      %703 = vmatpush1.msra.mxu0 0.0
      %704 = vmatprep.subr.mxu0 0.0
      %705 = vmatpush1.msra.mxu0 0.0
      %706 = vmatprep.subr.mxu0 0.0
      %707 = vmatpush1.msra.mxu0 0.0
      %708 = vmatprep.subr.mxu0 0.0
      %709 = vmatpush1.msra.mxu0 0.0
      %710 = vmatprep.subr.mxu0 0.0
      %711 = vmatpush1.msra.mxu0 0.0
      %712 = vmatprep.subr.mxu0 0.0
      %713 = vmatpush1.msra.mxu0 0.0
      %714 = vmatprep.mubr.f32.mxu0 0.0
      %715 = vmatmul.mubr.f32.gmra.mrb[0].mxu0 %v636
      %v716 = vpop.f32.mrb[0].mxu0
      %v717 = vadd.f32 %v632, %v716
      %v718 = vpop.f32.mrb[0].mxu0
      %719 = vmatprep.mubr.f32.mxu0 0.0
      %720 = vmatmul.mubr.f32.gmra.mrb[0].mxu0 %v639
      %v721 = vpop.f32.mrb[0].mxu0
      %v722 = vadd.f32 %v632, %v721
      %v723 = vpop.f32.mrb[0].mxu0
      %724 = vmatprep.mubr.f32.mxu0 0.0
      %725 = vmatmul.mubr.f32.gmra.mrb[0].mxu0 %v642
      %v726 = vpop.f32.mrb[0].mxu0
      %v727 = vadd.f32 %v632, %v726
      %v728 = vpop.f32.mrb[0].mxu0
      %729 = vmatprep.mubr.f32.mxu0 0.0
      %730 = vmatmul.mubr.f32.gmra.mrb[0].mxu0 %v645
      %v731 = vpop.f32.mrb[0].mxu0
      %v732 = vadd.f32 %v632, %v731
      %v733 = vpop.f32.mrb[0].mxu0
      %734 = vmatprep.mubr.f32.mxu0 0.0
      %735 = vmatmul.mubr.f32.gmra.mrb[0].mxu0 %v648
      %v736 = vpop.f32.mrb[0].mxu0
      %v737 = vadd.f32 %v632, %v736
      %v738 = vpop.f32.mrb[0].mxu0
      %739 = vdwg.mxu0
      %v740 = vmax.f32 %v717, 0.0
      %v741 = vmax.f32 %v722, 0.0
      %v742 = vmax.f32 %v727, 0.0
      %v743 = vmax.f32 %v732, 0.0
      %v744 = vmax.f32 %v737, 0.0
      %v745 = vpack.c.bf16 %v741, %v740
      %v746 = vpack.c.bf16 %v743, %v742
      %v747 = vpack.c.bf16 %v744, %v744
      %v751 = vunpack.c.l.b16 %v745
      %v752 = vunpack.c.h.b16 %v745
      %v753 = vunpack.c.l.b16 %v746
      %v754 = vunpack.c.h.b16 %v746
      %v755 = vunpack.c.l.b16 %v747
      %v756 = vpack.c.b16 %v751, %v751
      %v757 = vpack.c.b16 %v752, %v752
      %v758 = vpack.c.b16 %v753, %v753
      %v759 = vpack.c.b16 %v754, %v754
      %v760 = vpack.c.b16 %v755, %v755
      %vm766 = vcmask 60416
      %767 = vst.msk [vmem:[%s224] sm:$0xf] %vm766, %v756
      %768 = vst.msk [vmem:[%s224 + $0x4] sm:$0xf] %vm766, %v757
      %769 = vst.msk [vmem:[%s224 + $0x8] sm:$0xf] %vm766, %v758
      %770 = vst.msk [vmem:[%s224 + $0xc] sm:$0xf] %vm766, %v759
      %vm771 = vcmask 58368
      %vm772 = vsmask.f32 1280
      %vm773 = vmand %vm771, %vm772
      %v774 = vld [vmem:[%s224 + $0x10] sm:$0x3]
      %v775 = vsel %vm773, %v760, %v774
      %776 = vst [vmem:[%s224 + $0x10] sm:$0x3] %v775
      %p777 = scmp.lt.s32.totalorder %s16, 1
      %s778 = scalar_select %p777, %s16, 1
      %s779 = smul.addr %s778, 5
      %s780 = smul.addr %s779, 4
      %s781 = scalar_lea.vmem %s5, %s780
      // Predicated region
      $region41: #{_lambda_.3} parent=39 // pred_check
        %p782 = pneg %p144
      $region42: #{_lambda_.3} parent=39 // pred_check_branch
        %784 = sbr.rel (%p782) target = $region44
      $region43: #{_lambda_.3} parent=39 // pred_region
        _
      $region44: #{_lambda_.3} parent=39 // pred_fallthru
        _
    $region40: #{_lambda_.3} parent=5 // pred_fallthru
      _
    %p785 = scmp.le.s32.totalorder 2, %s11
    // Predicated region
    $region45: #{_lambda_.3} parent=5 // pred_check
      %p786 = pneg %p785
    $region46: #{_lambda_.3} parent=5 // pred_check_branch
      %788 = sbr.rel (%p786) target = $region48
    $region47: #{_lambda_.3} parent=5 // pred_region
      %s789 = ssub.s32 %s11, 2
      // Predicated region
      $region49: #{_lambda_.3} parent=47 // pred_check
        %p790 = pneg %p150
      $region50: #{_lambda_.3} parent=47 // pred_check_branch
        %792 = sbr.rel (%p790) target = $region52
      $region51: #{_lambda_.3} parent=47 // pred_region
        %p793 = scmp.lt.s32.totalorder %s17, 1
        %s794 = scalar_select %p793, %s17, 1
        %s795 = smul.addr %s794, 5
        %s796 = smul.addr %s795, 4
        %s797 = scalar_lea.vmem %s5, %s796
      $region52: #{_lambda_.3} parent=47 // pred_fallthru
        _
    $region48: #{_lambda_.3} parent=5 // pred_fallthru
      _
  $region6: #{_lambda_.3} parent=0 // loop_footer
    %s15 = sadd.s32 1, %s11
  $region7: #{_lambda_.3} parent=0 // loop_footer_branch
    %10 = sbr.rel target = $region3
  $region8: #{_lambda_.3} parent=0 // loop_exit
    _

</llo_original>
